<compile_context>
chip_gen: v5e
topology: v5e:2x2
jax: 0.10.0
libtpu: 0.0.40
codegen_flags: <defaults>
</compile_context>

<pallas_src>
import functools
from collections import namedtuple

import jax
import jax.numpy as jnp
from jax.experimental import pallas as pl
from jax.experimental.pallas import tpu as pltpu  # noqa: F401  (not needed at these shapes)

posterior_t = namedtuple("posterior", ["z", "mean", "logvar"])
prior_t = namedtuple("prior", ["z", "mean", "logvar"])

CONFIG = dict(p=2, d_model=32, timesteps=8, future=4, d_latent=16, M=10,
              num_layer=2, threshold=1e-8)


def _round_up(x, m):
    return -(-x // m) * m


def _layout(cfg):
    """Static row offsets for the packed parameter slabs.  Every segment starts
    on an 8-row (sublane-tile) boundary so all in-kernel window loads are
    aligned; offsets are plain Python ints (never traced)."""
    p, d, dl = cfg["p"], cfg["d_model"], cfg["d_latent"]
    T, F, M = cfg["timesteps"], cfg["future"], cfg["M"]
    FDL = F * dl

    def offsets(row_counts, align=8):
        offs, cur = [], 0
        for n in row_counts:
            cur = _round_up(cur, align)
            offs.append(cur)
            cur += n
        return tuple(offs), _round_up(cur, align)

    out_dim = (1 + (M + 1)) * p
    return dict(
        emb=offsets([p, 1, T, 1, 1, p, 1, F, 1, 1]),   # fcC_w,b, posC, lnC_g,b, fcT_w,b, posT, lnT_g,b
        head=offsets([2 * d, 1, 2 * d, 1]),            # pr_head_w,b, po_head_w,b
        fb=offsets([FDL, 1, FDL, 1]),                  # pr_fb_w,b,  po_fb_w,b
        spl=offsets([FDL, 1]),                         # spline w_blockdiag, b
        spl_width=max(128, _round_up(F * out_dim, 128)),
        spl_valid=F * out_dim,
    )


# -----------------------------------------------------------------------------
# The single fused kernel: embed+pool -> (prior|posterior) x num_layer -> spline
# -----------------------------------------------------------------------------
def _lsqf_kernel(xc_ref, xt_ref, emb_ref, head_ref, fb_ref, spl_ref, eps_ref,
                 prior_ref, post_ref, spline_ref,
                 *, B, T, F, p, d, dl, M, L, lay):
    FDL = F * dl
    f32 = jnp.float32

    # ---- fc + AddPosition2 (pos-emb + LayerNorm) + temporal mean pool -------
    def embed_branch(x_ref, seg, steps):
        o_w, o_b, o_pos, o_g, o_be = seg
        x = x_ref[...]                                   # (rows, p), rows = B*steps
        rows = x.shape[0]
        w = emb_ref[o_w:o_w + p, :]                      # (p, d)
        b = emb_ref[o_b:o_b + 1, :]
        pos = emb_ref[o_pos:o_pos + steps, :]            # (steps, d)
        g = emb_ref[o_g:o_g + 1, :]
        be = emb_ref[o_be:o_be + 1, :]
        # Linear(p -> d) with tiny K (p=2): explicit VPU FMAs, not an
        # under-filled MXU pass.
        h = b + x[:, 0:1] * w[0:1, :]
        for k in range(1, p):
            h = h + x[:, k:k + 1] * w[k:k + 1, :]
        # AddPosition2: broadcast the (steps, d) table over the batch with a
        # 0/1 selection matmul on the otherwise-idle MXU.  O(1) VALU ops.
        r = jax.lax.broadcasted_iota(jnp.int32, (rows, steps), 0)
        s = jax.lax.broadcasted_iota(jnp.int32, (rows, steps), 1)
        hit = ((r % steps) == s).astype(f32)
        h = h + jnp.dot(hit, pos, preferred_element_type=f32)
        # LayerNorm over the feature (lane) dim.
        mu = jnp.mean(h, axis=-1, keepdims=True)
        var = jnp.mean((h - mu) ** 2, axis=-1, keepdims=True)
        out = (h - mu) * jax.lax.rsqrt(var + 1e-5) * g + be
        # Fused per-batch temporal mean pool (selection matmul, again MXU).
        rr = jax.lax.broadcasted_iota(jnp.int32, (B, rows), 1)
        bb = jax.lax.broadcasted_iota(jnp.int32, (B, rows), 0)
        sel = jnp.where((rr >= bb * steps) & (rr < (bb + 1) * steps),
                        f32(1.0 / steps), f32(0.0))
        return jnp.dot(sel, out, preferred_element_type=f32)   # (B, d)

    eo = lay["emb"][0]
    pooled_c = embed_branch(xc_ref, eo[0:5], T)
    pooled_t = embed_branch(xt_ref, eo[5:10], F)
    pooled = jnp.concatenate([pooled_c, pooled_t], axis=-1)    # (B, 2d)

    # ---- latent-head params: static, sublane-aligned window loads -----------
    ho, fo = lay["head"][0], lay["fb"][0]
    D2 = 2 * d
    pr_hw = head_ref[ho[0]:ho[0] + D2, :]    # (2d, 3*FDL); target-half rows are 0
    pr_hb = head_ref[ho[1]:ho[1] + 1, :]
    po_hw = head_ref[ho[2]:ho[2] + D2, :]
    po_hb = head_ref[ho[3]:ho[3] + 1, :]
    pr_fw = fb_ref[fo[0]:fo[0] + FDL, :]     # (FDL, 2d); target-half cols are 0
    pr_fb = fb_ref[fo[1]:fo[1] + 1, :]
    po_fw = fb_ref[fo[2]:fo[2] + FDL, :]
    po_fb = fb_ref[fo[3]:fo[3] + 1, :]

    def latent_head(c, hw, hb, eps):
        head = jnp.dot(c, hw, preferred_element_type=f32) + hb       # (B, 3*FDL)
        col = jax.lax.broadcasted_iota(jnp.int32, head.shape, 1)
        head_t = jnp.where(col >= 2 * FDL, jnp.tanh(head), head)     # tanh on w block only
        w = head_t[:, 2 * FDL:]                                      # (B, FDL), 128-aligned slice
        # reparameterization (no logvar clamp, matching the reference forward)
        z = head[:, :FDL] + jnp.exp(0.5 * head[:, FDL:2 * FDL]) * eps
        return head_t, w, z

    prior_w = post_w = post_z = None
    for l in range(L):                                               # static unroll
        c_pr = pooled
        c_po = pooled
        if l > 0:
            c_pr = c_pr + jnp.dot(prior_w, pr_fw, preferred_element_type=f32) + pr_fb
            c_po = c_po + jnp.dot(post_w, po_fw, preferred_element_type=f32) + po_fb
        head_pr, prior_w, z_pr = latent_head(c_pr, pr_hw, pr_hb, eps_ref[2 * l])
        head_po, post_w, z_po = latent_head(c_po, po_hw, po_hb, eps_ref[2 * l + 1])
        # one dense 256-lane slab per layer/branch: [mean | logvar | w | z]
        prior_ref[l] = jnp.concatenate([head_pr, z_pr], axis=-1)
        post_ref[l] = jnp.concatenate([head_po, z_po], axis=-1)
        post_z = z_po

    # ---- all `future` spline heads in ONE block-diagonal matmul -------------
    so = lay["spl"][0]
    sw = spl_ref[so[0]:so[0] + FDL, :]                               # (FDL, spl_width)
    sb = spl_ref[so[1]:so[1] + 1, :]
    sp = jnp.dot(post_z, sw, preferred_element_type=f32) + sb        # (B, spl_width)
    scol = jax.lax.broadcasted_iota(jnp.int32, sp.shape, 1)
    chunk = M + 2
    keep_raw = ((scol % chunk) == 0) | (scol >= lay["spl_valid"])    # gamma cols + pad lanes
    spline_ref[...] = jnp.where(keep_raw, sp, jax.nn.softplus(sp))   # 128-lane dense store


# --------------------------- parameter init ----------------------------------
def _w_init(k, shape, fan_in=None):
    fi = fan_in if fan_in is not None else shape[-2]
    return jax.random.normal(k, shape, jnp.float32) / jnp.sqrt(float(fi))


def _pack_rows(parts, offs, total_rows):
    width = parts[0].shape[1]
    slab = jnp.zeros((total_rows, width), jnp.float32)
    for a, o in zip(parts, offs):
        slab = slab.at[o:o + a.shape[0], :].set(a.astype(jnp.float32))
    return slab


def init_params(cfg, key):
    p, d, dl = cfg["p"], cfg["d_model"], cfg["d_latent"]
    F, T, M = cfg["future"], cfg["timesteps"], cfg["M"]
    FDL = F * dl
    lay = _layout(cfg)
    ks = jax.random.split(key, 9)
    z1 = lambda n: jnp.zeros((1, n), jnp.float32)

    # embed slab (lane width d)
    emb_parts = [
        _w_init(ks[0], (p, d)), z1(d),
        0.02 * jax.random.normal(ks[1], (T, d), jnp.float32),
        jnp.ones((1, d), jnp.float32), z1(d),
        _w_init(ks[2], (p, d)), z1(d),
        0.02 * jax.random.normal(ks[3], (F, d), jnp.float32),
        jnp.ones((1, d), jnp.float32), z1(d),
    ]
    # fused latent heads (lane width 3*FDL), columns = [mean | logvar | w].
    # Prior conditions on h_C only: rows [d:2d] (pooled-target half) are zero,
    # so in-kernel it consumes the full 64-lane pooled_cat with no lane slice.
    pr_head_w = jnp.zeros((2 * d, 3 * FDL), jnp.float32).at[:d].set(_w_init(ks[4], (d, 3 * FDL)))
    po_head_w = _w_init(ks[5], (2 * d, 3 * FDL))
    head_parts = [pr_head_w, z1(3 * FDL), po_head_w, z1(3 * FDL)]
    # feedback linears w_prev -> ctx (lane width 2*d); prior output zero-padded.
    pr_fb_w = jnp.zeros((FDL, 2 * d), jnp.float32).at[:, :d].set(_w_init(ks[6], (FDL, d)))
    po_fb_w = _w_init(ks[7], (FDL, 2 * d))
    fb_parts = [pr_fb_w, z1(2 * d), po_fb_w, z1(2 * d)]
    # spline heads: Linear(d_latent -> (1+(M+1))*p) per future step, packed
    # block-diagonally and lane-padded to a multiple of 128 for a dense store.
    out_dim = (1 + (M + 1)) * p
    spline_w = _w_init(ks[8], (F, dl, out_dim), fan_in=dl)
    w_bd = jnp.zeros((FDL, lay["spl_width"]), jnp.float32)
    for t in range(F):
        w_bd = w_bd.at[t * dl:(t + 1) * dl, t * out_dim:(t + 1) * out_dim].set(spline_w[t])
    spl_parts = [w_bd, jnp.zeros((1, lay["spl_width"]), jnp.float32)]

    return {
        "emb_slab": _pack_rows(emb_parts, *lay["emb"]),
        "head_slab": _pack_rows(head_parts, *lay["head"]),
        "fb_slab": _pack_rows(fb_parts, *lay["fb"]),
        "spline_slab": _pack_rows(spl_parts, *lay["spl"]),
    }


# --------------------------- forward ------------------------------------------
def lsqf_forward(P, cfg, context_batch, target_batch, key):
    # TODO(synk): layers.AddPosition2 / PriorModule / PosteriorModule sources are
    # unavailable; implemented as pos-emb+LayerNorm and pooled-context Gaussian
    # latent heads (mean/logvar/w linears + reparameterization), as before.
    B, T, p = context_batch.shape
    F, dl, d = cfg["future"], cfg["d_latent"], cfg["d_model"]
    M, L = cfg["M"], cfg["num_layer"]
    FDL = F * dl
    lay = _layout(cfg)
    eps = jax.random.normal(key, (2 * L, B, FDL), jnp.float32)  # [pr0, po0, pr1, po1, ...]

    kern = functools.partial(_lsqf_kernel, B=B, T=T, F=F, p=p, d=d, dl=dl,
                             M=M, L=L, lay=lay)
    prior_pk, post_pk, spline_pk = pl.pallas_call(
        kern,
        out_shape=(jax.ShapeDtypeStruct((L, B, 4 * FDL), jnp.float32),
                   jax.ShapeDtypeStruct((L, B, 4 * FDL), jnp.float32),
                   jax.ShapeDtypeStruct((B, lay["spl_width"]), jnp.float32)),
    )(context_batch.reshape(B * T, p), target_batch.reshape(B * F, p),
      P["emb_slab"], P["head_slab"], P["fb_slab"], P["spline_slab"], eps)

    # packed per-layer lanes: [mean | logvar | w | z], each F*d_latent wide
    pr4 = prior_pk.reshape(L, B, 4, F, dl)
    po4 = post_pk.reshape(L, B, 4, F, dl)
    pri = prior_t(z=pr4[:, :, 3, :, None, :],
                  mean=pr4[:, :, 0, :, None, :],
                  logvar=pr4[:, :, 1, :, None, :])          # each (L, B, F, 1, dl)
    post = posterior_t(z=po4[:, :, 3, :, None, :],
                       mean=po4[:, :, 0, :, None, :],
                       logvar=po4[:, :, 1, :, None, :])

    feat = spline_pk[:, :lay["spl_valid"]].reshape(B, F, p, M + 2)
    gamma_all = feat[..., :1]                                # raw gamma     (B, F, p, 1)
    beta_all = feat[..., 1:]                                 # softplus'd    (B, F, p, M+1)
    delta = jnp.tile(jnp.linspace(0.0, 1.0, M + 1, dtype=jnp.float32)[None, :],
                     (B, 1))                                 # (B, M+1), shared by all (t, j)
    return pri, post, (gamma_all, beta_all, delta)


# ---- host-side (outside jit) converters to the torch-style nested lists ------
def latents_to_lists(packed):
    """(L, B, F, 1, dl) -> [layer][future step] of (B, 1, dl)."""
    L, _, F = packed.shape[:3]
    return [[packed[l, :, t] for t in range(F)] for l in range(L)]


def spline_params_to_lists(spl_packed, cfg):
    gamma_all, beta_all, delta = spl_packed
    F, p = cfg["future"], cfg["p"]
    params = []
    for t in range(F):
        params.append(([gamma_all[:, t, j, :] for j in range(p)],
                       [beta_all[:, t, j, :] for j in range(p)],
                       [delta for _ in range(p)]))
    return params


# --------------------------- main ---------------------------------------------
if __name__ == "__main__":
    cfg = CONFIG
    B = 2
    root = jax.random.PRNGKey(0)
    k_param, k_ctx, k_tgt, k_fwd = jax.random.split(root, 4)
    P = init_params(cfg, k_param)
    context_batch = jax.random.normal(
        k_ctx, (B, cfg["timesteps"], cfg["p"]), jnp.float32)
    target_batch = jax.random.normal(
        k_tgt, (B, cfg["future"], cfg["p"]), jnp.float32)

    fwd = jax.jit(lambda params, ctx, tgt, k: lsqf_forward(params, cfg, ctx, tgt, k))
    out = jax.block_until_ready(fwd(P, context_batch, target_batch, k_fwd))

    pri, post, spl = out
    L, F, dl, p, M = cfg["num_layer"], cfg["future"], cfg["d_latent"], cfg["p"], cfg["M"]
    assert pri.z.shape == (L, B, F, 1, dl)
    assert pri.mean.shape == (L, B, F, 1, dl)
    assert post.logvar.shape == (L, B, F, 1, dl)
    gamma_all, beta_all, delta = spl
    assert gamma_all.shape == (B, F, p, 1)
    assert beta_all.shape == (B, F, p, M + 1)
    assert delta.shape == (B, M + 1)
    assert bool(jnp.all(jnp.isfinite(pri.z))) and bool(jnp.all(jnp.isfinite(post.z)))
    assert bool(jnp.all(jnp.isfinite(beta_all)))
    assert bool(jnp.all(beta_all >= 0.0))                    # softplus output
    # torch-compatible nested-list views (host side, concrete arrays)
    pz_lists = latents_to_lists(pri.z)
    assert len(pz_lists) == L and len(pz_lists[0]) == F
    assert pz_lists[0][0].shape == (B, 1, dl)
    spl_lists = spline_params_to_lists(spl, cfg)
    assert len(spl_lists) == F
    assert spl_lists[0][0][0].shape == (B, 1)                # gamma (raw)
    assert spl_lists[0][1][0].shape == (B, M + 1)            # beta (softplus'd)
    assert spl_lists[0][2][0].shape == (B, M + 1)            # delta
    print("KERNEL_OK")
</pallas_src>

<mosaic_0001>
module attributes {stable_mosaic.version = 11 : i64} {
  func.func @_lsqf_kernel(%arg0: memref<16x2xf32, #tpu.memory_space<vmem>>, %arg1: memref<8x2xf32, #tpu.memory_space<vmem>>, %arg2: memref<80x32xf32, #tpu.memory_space<vmem>>, %arg3: memref<144x192xf32, #tpu.memory_space<vmem>>, %arg4: memref<144x64xf32, #tpu.memory_space<vmem>>, %arg5: memref<72x128xf32, #tpu.memory_space<vmem>>, %arg6: memref<4x2x64xf32, #tpu.memory_space<vmem>>, %arg7: memref<2x2x256xf32, #tpu.memory_space<vmem>>, %arg8: memref<2x2x256xf32, #tpu.memory_space<vmem>>, %arg9: memref<2x128xf32, #tpu.memory_space<vmem>>) attributes {dimension_semantics = [], scalar_prefetch = 0 : i64, scratch_operands = 0 : i64, tpu.core_type = #tpu.core_type<tc>} {
    %c0 = arith.constant 0 : index
    %c0_0 = arith.constant 0 : index
    %0 = vector.load %arg0[%c0, %c0_0] : memref<16x2xf32, #tpu.memory_space<vmem>>, vector<16x2xf32>
    %c0_1 = arith.constant 0 : index
    %c0_2 = arith.constant 0 : index
    %1 = vector.load %arg2[%c0_1, %c0_2] : memref<80x32xf32, #tpu.memory_space<vmem>>, vector<2x32xf32>
    %c8 = arith.constant 8 : index
    %c0_3 = arith.constant 0 : index
    %2 = vector.load %arg2[%c8, %c0_3] : memref<80x32xf32, #tpu.memory_space<vmem>>, vector<1x32xf32>
    %c16 = arith.constant 16 : index
    %c0_4 = arith.constant 0 : index
    %3 = vector.load %arg2[%c16, %c0_4] : memref<80x32xf32, #tpu.memory_space<vmem>>, vector<8x32xf32>
    %c24 = arith.constant 24 : index
    %c0_5 = arith.constant 0 : index
    %4 = vector.load %arg2[%c24, %c0_5] : memref<80x32xf32, #tpu.memory_space<vmem>>, vector<1x32xf32>
    %c32 = arith.constant 32 : index
    %c0_6 = arith.constant 0 : index
    %5 = vector.load %arg2[%c32, %c0_6] : memref<80x32xf32, #tpu.memory_space<vmem>>, vector<1x32xf32>
    %6 = vector.extract_strided_slice %0 {offsets = [0, 0], sizes = [16, 1], strides = [1, 1]} : vector<16x2xf32> to vector<16x1xf32>
    %7 = vector.extract_strided_slice %1 {offsets = [0, 0], sizes = [1, 32], strides = [1, 1]} : vector<2x32xf32> to vector<1x32xf32>
    %8 = vector.broadcast %6 : vector<16x1xf32> to vector<16x32xf32>
    %9 = vector.broadcast %7 : vector<1x32xf32> to vector<16x32xf32>
    %10 = arith.mulf %8, %9 : vector<16x32xf32>
    %11 = vector.broadcast %2 : vector<1x32xf32> to vector<16x32xf32>
    %12 = arith.addf %11, %10 : vector<16x32xf32>
    %13 = vector.extract_strided_slice %0 {offsets = [0, 1], sizes = [16, 1], strides = [1, 1]} : vector<16x2xf32> to vector<16x1xf32>
    %14 = vector.extract_strided_slice %1 {offsets = [1, 0], sizes = [1, 32], strides = [1, 1]} : vector<2x32xf32> to vector<1x32xf32>
    %15 = vector.broadcast %13 : vector<16x1xf32> to vector<16x32xf32>
    %16 = vector.broadcast %14 : vector<1x32xf32> to vector<16x32xf32>
    %17 = arith.mulf %15, %16 : vector<16x32xf32>
    %18 = arith.addf %12, %17 : vector<16x32xf32>
    %19 = tpu.iota {dimensions = array<i32: 0>} : vector<16x8xi32>
    %20 = tpu.iota {dimensions = array<i32: 1>} : vector<16x8xi32>
    %c8_i32 = arith.constant 8 : i32
    %c0_i32 = arith.constant 0 : i32
    %21 = arith.cmpi eq, %c8_i32, %c0_i32 : i32
    %c1_i32 = arith.constant 1 : i32
    %22 = arith.select %21, %c1_i32, %c8_i32 : i32
    %23 = vector.broadcast %22 : i32 to vector<16x8xi32>
    %24 = arith.remsi %19, %23 : vector<16x8xi32>
    %c0_i32_7 = arith.constant 0 : i32
    %25 = vector.broadcast %c0_i32_7 : i32 to vector<16x8xi32>
    %26 = arith.cmpi ne, %24, %25 : vector<16x8xi32>
    %c0_i32_8 = arith.constant 0 : i32
    %27 = vector.broadcast %c0_i32_8 : i32 to vector<16x8xi32>
    %28 = arith.cmpi slt, %24, %27 : vector<16x8xi32>
    %c0_i32_9 = arith.constant 0 : i32
    %29 = arith.cmpi slt, %22, %c0_i32_9 : i32
    %30 = vector.broadcast %29 : i1 to vector<16x8xi1>
    %31 = vector.broadcast %30 : vector<16x8xi1> to vector<16x8xi1>
    %32 = arith.xori %28, %31 : vector<16x8xi1>
    %33 = arith.andi %32, %26 : vector<16x8xi1>
    %34 = vector.broadcast %22 : i32 to vector<16x8xi32>
    %35 = arith.addi %24, %34 : vector<16x8xi32>
    %36 = arith.select %33, %35, %24 : vector<16x8xi1>, vector<16x8xi32>
    %37 = arith.cmpi eq, %36, %20 : vector<16x8xi32>
    %38 = arith.extui %37 : vector<16x8xi1> to vector<16x8xi32>
    %39 = arith.sitofp %38 : vector<16x8xi32> to vector<16x8xf32>
    %cst = arith.constant dense<0.000000e+00> : vector<16x32xf32>
    %40 = tpu.matmul %39, %3, %cst {dimension_numbers = #tpu.dot_dimension_numbers<[1], [0], [0], [1], [0, 0, 1, 1], [], []>} : vector<16x8xf32>, vector<8x32xf32>, vector<16x32xf32> -> vector<16x32xf32>
    %41 = arith.addf %18, %40 : vector<16x32xf32>
    %cst_10 = arith.constant dense<0.000000e+00> : vector<16xf32>
    %42 = vector.multi_reduction <add>, %41, %cst_10 [1] : vector<16x32xf32> to vector<16xf32>
    %43 = vector.shape_cast %42 : vector<16xf32> to vector<16x1xf32>
    %cst_11 = arith.constant 3.200000e+01 : f32
    %44 = vector.broadcast %cst_11 : f32 to vector<16x1xf32>
    %45 = arith.divf %43, %44 : vector<16x1xf32>
    %46 = vector.broadcast %45 : vector<16x1xf32> to vector<16x32xf32>
    %47 = arith.subf %41, %46 : vector<16x32xf32>
    %48 = arith.mulf %47, %47 : vector<16x32xf32>
    %cst_12 = arith.constant dense<0.000000e+00> : vector<16xf32>
    %49 = vector.multi_reduction <add>, %48, %cst_12 [1] : vector<16x32xf32> to vector<16xf32>
    %50 = vector.shape_cast %49 : vector<16xf32> to vector<16x1xf32>
    %cst_13 = arith.constant 3.200000e+01 : f32
    %51 = vector.broadcast %cst_13 : f32 to vector<16x1xf32>
    %52 = arith.divf %50, %51 : vector<16x1xf32>
    %53 = vector.broadcast %45 : vector<16x1xf32> to vector<16x32xf32>
    %54 = arith.subf %41, %53 : vector<16x32xf32>
    %cst_14 = arith.constant 9.99999974E-6 : f32
    %55 = vector.broadcast %cst_14 : f32 to vector<16x1xf32>
    %56 = arith.addf %52, %55 : vector<16x1xf32>
    %57 = math.rsqrt %56 : vector<16x1xf32>
    %58 = vector.broadcast %57 : vector<16x1xf32> to vector<16x32xf32>
    %59 = arith.mulf %54, %58 : vector<16x32xf32>
    %60 = vector.broadcast %4 : vector<1x32xf32> to vector<16x32xf32>
    %61 = arith.mulf %59, %60 : vector<16x32xf32>
    %62 = vector.broadcast %5 : vector<1x32xf32> to vector<16x32xf32>
    %63 = arith.addf %61, %62 : vector<16x32xf32>
    %64 = tpu.iota {dimensions = array<i32: 1>} : vector<2x16xi32>
    %65 = tpu.iota {dimensions = array<i32: 0>} : vector<2x16xi32>
    %c8_i32_15 = arith.constant 8 : i32
    %66 = vector.broadcast %c8_i32_15 : i32 to vector<2x16xi32>
    %67 = arith.muli %65, %66 : vector<2x16xi32>
    %68 = arith.cmpi sge, %64, %67 : vector<2x16xi32>
    %c1_i32_16 = arith.constant 1 : i32
    %69 = vector.broadcast %c1_i32_16 : i32 to vector<2x16xi32>
    %70 = arith.addi %65, %69 : vector<2x16xi32>
    %c8_i32_17 = arith.constant 8 : i32
    %71 = vector.broadcast %c8_i32_17 : i32 to vector<2x16xi32>
    %72 = arith.muli %70, %71 : vector<2x16xi32>
    %73 = arith.cmpi slt, %64, %72 : vector<2x16xi32>
    %74 = arith.andi %68, %73 : vector<2x16xi1>
    %cst_18 = arith.constant 1.250000e-01 : f32
    %cst_19 = arith.constant 0.000000e+00 : f32
    %75 = vector.broadcast %cst_18 : f32 to vector<2x16xf32>
    %76 = vector.broadcast %cst_19 : f32 to vector<2x16xf32>
    %77 = arith.select %74, %75, %76 : vector<2x16xi1>, vector<2x16xf32>
    %cst_20 = arith.constant dense<0.000000e+00> : vector<2x32xf32>
    %78 = tpu.matmul %77, %63, %cst_20 {dimension_numbers = #tpu.dot_dimension_numbers<[1], [0], [0], [1], [0, 0, 1, 1], [], []>} : vector<2x16xf32>, vector<16x32xf32>, vector<2x32xf32> -> vector<2x32xf32>
    %c0_21 = arith.constant 0 : index
    %c0_22 = arith.constant 0 : index
    %79 = vector.load %arg1[%c0_21, %c0_22] : memref<8x2xf32, #tpu.memory_space<vmem>>, vector<8x2xf32>
    %c40 = arith.constant 40 : index
    %c0_23 = arith.constant 0 : index
    %80 = vector.load %arg2[%c40, %c0_23] : memref<80x32xf32, #tpu.memory_space<vmem>>, vector<2x32xf32>
    %c48 = arith.constant 48 : index
    %c0_24 = arith.constant 0 : index
    %81 = vector.load %arg2[%c48, %c0_24] : memref<80x32xf32, #tpu.memory_space<vmem>>, vector<1x32xf32>
    %c56 = arith.constant 56 : index
    %c0_25 = arith.constant 0 : index
    %82 = vector.load %arg2[%c56, %c0_25] : memref<80x32xf32, #tpu.memory_space<vmem>>, vector<4x32xf32>
    %c64 = arith.constant 64 : index
    %c0_26 = arith.constant 0 : index
    %83 = vector.load %arg2[%c64, %c0_26] : memref<80x32xf32, #tpu.memory_space<vmem>>, vector<1x32xf32>
    %c72 = arith.constant 72 : index
    %c0_27 = arith.constant 0 : index
    %84 = vector.load %arg2[%c72, %c0_27] : memref<80x32xf32, #tpu.memory_space<vmem>>, vector<1x32xf32>
    %85 = vector.extract_strided_slice %79 {offsets = [0, 0], sizes = [8, 1], strides = [1, 1]} : vector<8x2xf32> to vector<8x1xf32>
    %86 = vector.extract_strided_slice %80 {offsets = [0, 0], sizes = [1, 32], strides = [1, 1]} : vector<2x32xf32> to vector<1x32xf32>
    %87 = vector.broadcast %85 : vector<8x1xf32> to vector<8x32xf32>
    %88 = vector.broadcast %86 : vector<1x32xf32> to vector<8x32xf32>
    %89 = arith.mulf %87, %88 : vector<8x32xf32>
    %90 = vector.broadcast %81 : vector<1x32xf32> to vector<8x32xf32>
    %91 = arith.addf %90, %89 : vector<8x32xf32>
    %92 = vector.extract_strided_slice %79 {offsets = [0, 1], sizes = [8, 1], strides = [1, 1]} : vector<8x2xf32> to vector<8x1xf32>
    %93 = vector.extract_strided_slice %80 {offsets = [1, 0], sizes = [1, 32], strides = [1, 1]} : vector<2x32xf32> to vector<1x32xf32>
    %94 = vector.broadcast %92 : vector<8x1xf32> to vector<8x32xf32>
    %95 = vector.broadcast %93 : vector<1x32xf32> to vector<8x32xf32>
    %96 = arith.mulf %94, %95 : vector<8x32xf32>
    %97 = arith.addf %91, %96 : vector<8x32xf32>
    %98 = tpu.iota {dimensions = array<i32: 0>} : vector<8x4xi32>
    %99 = tpu.iota {dimensions = array<i32: 1>} : vector<8x4xi32>
    %c4_i32 = arith.constant 4 : i32
    %c0_i32_28 = arith.constant 0 : i32
    %100 = arith.cmpi eq, %c4_i32, %c0_i32_28 : i32
    %c1_i32_29 = arith.constant 1 : i32
    %101 = arith.select %100, %c1_i32_29, %c4_i32 : i32
    %102 = vector.broadcast %101 : i32 to vector<8x4xi32>
    %103 = arith.remsi %98, %102 : vector<8x4xi32>
    %c0_i32_30 = arith.constant 0 : i32
    %104 = vector.broadcast %c0_i32_30 : i32 to vector<8x4xi32>
    %105 = arith.cmpi ne, %103, %104 : vector<8x4xi32>
    %c0_i32_31 = arith.constant 0 : i32
    %106 = vector.broadcast %c0_i32_31 : i32 to vector<8x4xi32>
    %107 = arith.cmpi slt, %103, %106 : vector<8x4xi32>
    %c0_i32_32 = arith.constant 0 : i32
    %108 = arith.cmpi slt, %101, %c0_i32_32 : i32
    %109 = vector.broadcast %108 : i1 to vector<8x4xi1>
    %110 = vector.broadcast %109 : vector<8x4xi1> to vector<8x4xi1>
    %111 = arith.xori %107, %110 : vector<8x4xi1>
    %112 = arith.andi %111, %105 : vector<8x4xi1>
    %113 = vector.broadcast %101 : i32 to vector<8x4xi32>
    %114 = arith.addi %103, %113 : vector<8x4xi32>
    %115 = arith.select %112, %114, %103 : vector<8x4xi1>, vector<8x4xi32>
    %116 = arith.cmpi eq, %115, %99 : vector<8x4xi32>
    %117 = arith.extui %116 : vector<8x4xi1> to vector<8x4xi32>
    %118 = arith.sitofp %117 : vector<8x4xi32> to vector<8x4xf32>
    %cst_33 = arith.constant dense<0.000000e+00> : vector<8x32xf32>
    %119 = tpu.matmul %118, %82, %cst_33 {dimension_numbers = #tpu.dot_dimension_numbers<[1], [0], [0], [1], [0, 0, 1, 1], [], []>} : vector<8x4xf32>, vector<4x32xf32>, vector<8x32xf32> -> vector<8x32xf32>
    %120 = arith.addf %97, %119 : vector<8x32xf32>
    %cst_34 = arith.constant dense<0.000000e+00> : vector<8xf32>
    %121 = vector.multi_reduction <add>, %120, %cst_34 [1] : vector<8x32xf32> to vector<8xf32>
    %122 = vector.shape_cast %121 : vector<8xf32> to vector<8x1xf32>
    %cst_35 = arith.constant 3.200000e+01 : f32
    %123 = vector.broadcast %cst_35 : f32 to vector<8x1xf32>
    %124 = arith.divf %122, %123 : vector<8x1xf32>
    %125 = vector.broadcast %124 : vector<8x1xf32> to vector<8x32xf32>
    %126 = arith.subf %120, %125 : vector<8x32xf32>
    %127 = arith.mulf %126, %126 : vector<8x32xf32>
    %cst_36 = arith.constant dense<0.000000e+00> : vector<8xf32>
    %128 = vector.multi_reduction <add>, %127, %cst_36 [1] : vector<8x32xf32> to vector<8xf32>
    %129 = vector.shape_cast %128 : vector<8xf32> to vector<8x1xf32>
    %cst_37 = arith.constant 3.200000e+01 : f32
    %130 = vector.broadcast %cst_37 : f32 to vector<8x1xf32>
    %131 = arith.divf %129, %130 : vector<8x1xf32>
    %132 = vector.broadcast %124 : vector<8x1xf32> to vector<8x32xf32>
    %133 = arith.subf %120, %132 : vector<8x32xf32>
    %cst_38 = arith.constant 9.99999974E-6 : f32
    %134 = vector.broadcast %cst_38 : f32 to vector<8x1xf32>
    %135 = arith.addf %131, %134 : vector<8x1xf32>
    %136 = math.rsqrt %135 : vector<8x1xf32>
    %137 = vector.broadcast %136 : vector<8x1xf32> to vector<8x32xf32>
    %138 = arith.mulf %133, %137 : vector<8x32xf32>
    %139 = vector.broadcast %83 : vector<1x32xf32> to vector<8x32xf32>
    %140 = arith.mulf %138, %139 : vector<8x32xf32>
    %141 = vector.broadcast %84 : vector<1x32xf32> to vector<8x32xf32>
    %142 = arith.addf %140, %141 : vector<8x32xf32>
    %143 = tpu.iota {dimensions = array<i32: 1>} : vector<2x8xi32>
    %144 = tpu.iota {dimensions = array<i32: 0>} : vector<2x8xi32>
    %c4_i32_39 = arith.constant 4 : i32
    %145 = vector.broadcast %c4_i32_39 : i32 to vector<2x8xi32>
    %146 = arith.muli %144, %145 : vector<2x8xi32>
    %147 = arith.cmpi sge, %143, %146 : vector<2x8xi32>
    %c1_i32_40 = arith.constant 1 : i32
    %148 = vector.broadcast %c1_i32_40 : i32 to vector<2x8xi32>
    %149 = arith.addi %144, %148 : vector<2x8xi32>
    %c4_i32_41 = arith.constant 4 : i32
    %150 = vector.broadcast %c4_i32_41 : i32 to vector<2x8xi32>
    %151 = arith.muli %149, %150 : vector<2x8xi32>
    %152 = arith.cmpi slt, %143, %151 : vector<2x8xi32>
    %153 = arith.andi %147, %152 : vector<2x8xi1>
    %cst_42 = arith.constant 2.500000e-01 : f32
    %cst_43 = arith.constant 0.000000e+00 : f32
    %154 = vector.broadcast %cst_42 : f32 to vector<2x8xf32>
    %155 = vector.broadcast %cst_43 : f32 to vector<2x8xf32>
    %156 = arith.select %153, %154, %155 : vector<2x8xi1>, vector<2x8xf32>
    %cst_44 = arith.constant dense<0.000000e+00> : vector<2x32xf32>
    %157 = tpu.matmul %156, %142, %cst_44 {dimension_numbers = #tpu.dot_dimension_numbers<[1], [0], [0], [1], [0, 0, 1, 1], [], []>} : vector<2x8xf32>, vector<8x32xf32>, vector<2x32xf32> -> vector<2x32xf32>
    %158 = tpu.concatenate %78, %157 in 1 : vector<2x32xf32>, vector<2x32xf32> -> vector<2x64xf32>
    %c0_45 = arith.constant 0 : index
    %c0_46 = arith.constant 0 : index
    %159 = vector.load %arg3[%c0_45, %c0_46] : memref<144x192xf32, #tpu.memory_space<vmem>>, vector<64x192xf32>
    %c64_47 = arith.constant 64 : index
    %c0_48 = arith.constant 0 : index
    %160 = vector.load %arg3[%c64_47, %c0_48] : memref<144x192xf32, #tpu.memory_space<vmem>>, vector<1x192xf32>
    %c72_49 = arith.constant 72 : index
    %c0_50 = arith.constant 0 : index
    %161 = vector.load %arg3[%c72_49, %c0_50] : memref<144x192xf32, #tpu.memory_space<vmem>>, vector<64x192xf32>
    %c136 = arith.constant 136 : index
    %c0_51 = arith.constant 0 : index
    %162 = vector.load %arg3[%c136, %c0_51] : memref<144x192xf32, #tpu.memory_space<vmem>>, vector<1x192xf32>
    %c0_52 = arith.constant 0 : index
    %c0_53 = arith.constant 0 : index
    %163 = vector.load %arg4[%c0_52, %c0_53] : memref<144x64xf32, #tpu.memory_space<vmem>>, vector<64x64xf32>
    %c64_54 = arith.constant 64 : index
    %c0_55 = arith.constant 0 : index
    %164 = vector.load %arg4[%c64_54, %c0_55] : memref<144x64xf32, #tpu.memory_space<vmem>>, vector<1x64xf32>
    %c72_56 = arith.constant 72 : index
    %c0_57 = arith.constant 0 : index
    %165 = vector.load %arg4[%c72_56, %c0_57] : memref<144x64xf32, #tpu.memory_space<vmem>>, vector<64x64xf32>
    %c136_58 = arith.constant 136 : index
    %c0_59 = arith.constant 0 : index
    %166 = vector.load %arg4[%c136_58, %c0_59] : memref<144x64xf32, #tpu.memory_space<vmem>>, vector<1x64xf32>
    %c0_60 = arith.constant 0 : index
    %c0_61 = arith.constant 0 : index
    %c0_62 = arith.constant 0 : index
    %167 = vector.load %arg6[%c0_60, %c0_61, %c0_62] : memref<4x2x64xf32, #tpu.memory_space<vmem>>, vector<1x2x64xf32>
    %168 = vector.shape_cast %167 : vector<1x2x64xf32> to vector<2x64xf32>
    %cst_63 = arith.constant dense<0.000000e+00> : vector<2x192xf32>
    %169 = tpu.matmul %158, %159, %cst_63 {dimension_numbers = #tpu.dot_dimension_numbers<[1], [0], [0], [1], [0, 0, 1, 1], [], []>} : vector<2x64xf32>, vector<64x192xf32>, vector<2x192xf32> -> vector<2x192xf32>
    %170 = vector.broadcast %160 : vector<1x192xf32> to vector<2x192xf32>
    %171 = arith.addf %169, %170 : vector<2x192xf32>
    %172 = tpu.iota {dimensions = array<i32: 1>} : vector<2x192xi32>
    %c128_i32 = arith.constant 128 : i32
    %173 = vector.broadcast %c128_i32 : i32 to vector<2x192xi32>
    %174 = arith.cmpi sge, %172, %173 : vector<2x192xi32>
    %175 = math.tanh %171 : vector<2x192xf32>
    %176 = arith.select %174, %175, %171 : vector<2x192xi1>, vector<2x192xf32>
    %177 = vector.extract_strided_slice %176 {offsets = [0, 128], sizes = [2, 64], strides = [1, 1]} : vector<2x192xf32> to vector<2x64xf32>
    %178 = vector.extract_strided_slice %171 {offsets = [0, 0], sizes = [2, 64], strides = [1, 1]} : vector<2x192xf32> to vector<2x64xf32>
    %179 = vector.extract_strided_slice %171 {offsets = [0, 64], sizes = [2, 64], strides = [1, 1]} : vector<2x192xf32> to vector<2x64xf32>
    %cst_64 = arith.constant 5.000000e-01 : f32
    %180 = vector.broadcast %cst_64 : f32 to vector<2x64xf32>
    %181 = arith.mulf %180, %179 : vector<2x64xf32>
    %182 = math.exp %181 : vector<2x64xf32>
    %183 = arith.mulf %182, %168 : vector<2x64xf32>
    %184 = arith.addf %178, %183 : vector<2x64xf32>
    %c1 = arith.constant 1 : index
    %c0_65 = arith.constant 0 : index
    %c0_66 = arith.constant 0 : index
    %185 = vector.load %arg6[%c1, %c0_65, %c0_66] : memref<4x2x64xf32, #tpu.memory_space<vmem>>, vector<1x2x64xf32>
    %186 = vector.shape_cast %185 : vector<1x2x64xf32> to vector<2x64xf32>
    %cst_67 = arith.constant dense<0.000000e+00> : vector<2x192xf32>
    %187 = tpu.matmul %158, %161, %cst_67 {dimension_numbers = #tpu.dot_dimension_numbers<[1], [0], [0], [1], [0, 0, 1, 1], [], []>} : vector<2x64xf32>, vector<64x192xf32>, vector<2x192xf32> -> vector<2x192xf32>
    %188 = vector.broadcast %162 : vector<1x192xf32> to vector<2x192xf32>
    %189 = arith.addf %187, %188 : vector<2x192xf32>
    %190 = tpu.iota {dimensions = array<i32: 1>} : vector<2x192xi32>
    %c128_i32_68 = arith.constant 128 : i32
    %191 = vector.broadcast %c128_i32_68 : i32 to vector<2x192xi32>
    %192 = arith.cmpi sge, %190, %191 : vector<2x192xi32>
    %193 = math.tanh %189 : vector<2x192xf32>
    %194 = arith.select %192, %193, %189 : vector<2x192xi1>, vector<2x192xf32>
    %195 = vector.extract_strided_slice %194 {offsets = [0, 128], sizes = [2, 64], strides = [1, 1]} : vector<2x192xf32> to vector<2x64xf32>
    %196 = vector.extract_strided_slice %189 {offsets = [0, 0], sizes = [2, 64], strides = [1, 1]} : vector<2x192xf32> to vector<2x64xf32>
    %197 = vector.extract_strided_slice %189 {offsets = [0, 64], sizes = [2, 64], strides = [1, 1]} : vector<2x192xf32> to vector<2x64xf32>
    %cst_69 = arith.constant 5.000000e-01 : f32
    %198 = vector.broadcast %cst_69 : f32 to vector<2x64xf32>
    %199 = arith.mulf %198, %197 : vector<2x64xf32>
    %200 = math.exp %199 : vector<2x64xf32>
    %201 = arith.mulf %200, %186 : vector<2x64xf32>
    %202 = arith.addf %196, %201 : vector<2x64xf32>
    %203 = tpu.concatenate %176, %184 in 1 : vector<2x192xf32>, vector<2x64xf32> -> vector<2x256xf32>
    %c0_70 = arith.constant 0 : index
    %c0_71 = arith.constant 0 : index
    %c0_72 = arith.constant 0 : index
    %204 = vector.load %arg7[%c0_70, %c0_71, %c0_72] : memref<2x2x256xf32, #tpu.memory_space<vmem>>, vector<1x2x256xf32>
    %205 = vector.shape_cast %204 : vector<1x2x256xf32> to vector<2x256xf32>
    %206 = vector.shape_cast %203 : vector<2x256xf32> to vector<1x2x256xf32>
    tpu.vector_store %arg7[%c0_70, %c0_71, %c0_72], %206 {strides = array<i32>} : memref<2x2x256xf32, #tpu.memory_space<vmem>>, vector<1x2x256xf32>,
    %207 = tpu.concatenate %194, %202 in 1 : vector<2x192xf32>, vector<2x64xf32> -> vector<2x256xf32>
    %c0_73 = arith.constant 0 : index
    %c0_74 = arith.constant 0 : index
    %c0_75 = arith.constant 0 : index
    %208 = vector.load %arg8[%c0_73, %c0_74, %c0_75] : memref<2x2x256xf32, #tpu.memory_space<vmem>>, vector<1x2x256xf32>
    %209 = vector.shape_cast %208 : vector<1x2x256xf32> to vector<2x256xf32>
    %210 = vector.shape_cast %207 : vector<2x256xf32> to vector<1x2x256xf32>
    tpu.vector_store %arg8[%c0_73, %c0_74, %c0_75], %210 {strides = array<i32>} : memref<2x2x256xf32, #tpu.memory_space<vmem>>, vector<1x2x256xf32>,
    %cst_76 = arith.constant dense<0.000000e+00> : vector<2x64xf32>
    %211 = tpu.matmul %177, %163, %cst_76 {dimension_numbers = #tpu.dot_dimension_numbers<[1], [0], [0], [1], [0, 0, 1, 1], [], []>} : vector<2x64xf32>, vector<64x64xf32>, vector<2x64xf32> -> vector<2x64xf32>
    %212 = arith.addf %158, %211 : vector<2x64xf32>
    %213 = vector.broadcast %164 : vector<1x64xf32> to vector<2x64xf32>
    %214 = arith.addf %212, %213 : vector<2x64xf32>
    %cst_77 = arith.constant dense<0.000000e+00> : vector<2x64xf32>
    %215 = tpu.matmul %195, %165, %cst_77 {dimension_numbers = #tpu.dot_dimension_numbers<[1], [0], [0], [1], [0, 0, 1, 1], [], []>} : vector<2x64xf32>, vector<64x64xf32>, vector<2x64xf32> -> vector<2x64xf32>
    %216 = arith.addf %158, %215 : vector<2x64xf32>
    %217 = vector.broadcast %166 : vector<1x64xf32> to vector<2x64xf32>
    %218 = arith.addf %216, %217 : vector<2x64xf32>
    %c2 = arith.constant 2 : index
    %c0_78 = arith.constant 0 : index
    %c0_79 = arith.constant 0 : index
    %219 = vector.load %arg6[%c2, %c0_78, %c0_79] : memref<4x2x64xf32, #tpu.memory_space<vmem>>, vector<1x2x64xf32>
    %220 = vector.shape_cast %219 : vector<1x2x64xf32> to vector<2x64xf32>
    %cst_80 = arith.constant dense<0.000000e+00> : vector<2x192xf32>
    %221 = tpu.matmul %214, %159, %cst_80 {dimension_numbers = #tpu.dot_dimension_numbers<[1], [0], [0], [1], [0, 0, 1, 1], [], []>} : vector<2x64xf32>, vector<64x192xf32>, vector<2x192xf32> -> vector<2x192xf32>
    %222 = vector.broadcast %160 : vector<1x192xf32> to vector<2x192xf32>
    %223 = arith.addf %221, %222 : vector<2x192xf32>
    %224 = tpu.iota {dimensions = array<i32: 1>} : vector<2x192xi32>
    %c128_i32_81 = arith.constant 128 : i32
    %225 = vector.broadcast %c128_i32_81 : i32 to vector<2x192xi32>
    %226 = arith.cmpi sge, %224, %225 : vector<2x192xi32>
    %227 = math.tanh %223 : vector<2x192xf32>
    %228 = arith.select %226, %227, %223 : vector<2x192xi1>, vector<2x192xf32>
    %229 = vector.extract_strided_slice %223 {offsets = [0, 0], sizes = [2, 64], strides = [1, 1]} : vector<2x192xf32> to vector<2x64xf32>
    %230 = vector.extract_strided_slice %223 {offsets = [0, 64], sizes = [2, 64], strides = [1, 1]} : vector<2x192xf32> to vector<2x64xf32>
    %cst_82 = arith.constant 5.000000e-01 : f32
    %231 = vector.broadcast %cst_82 : f32 to vector<2x64xf32>
    %232 = arith.mulf %231, %230 : vector<2x64xf32>
    %233 = math.exp %232 : vector<2x64xf32>
    %234 = arith.mulf %233, %220 : vector<2x64xf32>
    %235 = arith.addf %229, %234 : vector<2x64xf32>
    %c3 = arith.constant 3 : index
    %c0_83 = arith.constant 0 : index
    %c0_84 = arith.constant 0 : index
    %236 = vector.load %arg6[%c3, %c0_83, %c0_84] : memref<4x2x64xf32, #tpu.memory_space<vmem>>, vector<1x2x64xf32>
    %237 = vector.shape_cast %236 : vector<1x2x64xf32> to vector<2x64xf32>
    %cst_85 = arith.constant dense<0.000000e+00> : vector<2x192xf32>
    %238 = tpu.matmul %218, %161, %cst_85 {dimension_numbers = #tpu.dot_dimension_numbers<[1], [0], [0], [1], [0, 0, 1, 1], [], []>} : vector<2x64xf32>, vector<64x192xf32>, vector<2x192xf32> -> vector<2x192xf32>
    %239 = vector.broadcast %162 : vector<1x192xf32> to vector<2x192xf32>
    %240 = arith.addf %238, %239 : vector<2x192xf32>
    %241 = tpu.iota {dimensions = array<i32: 1>} : vector<2x192xi32>
    %c128_i32_86 = arith.constant 128 : i32
    %242 = vector.broadcast %c128_i32_86 : i32 to vector<2x192xi32>
    %243 = arith.cmpi sge, %241, %242 : vector<2x192xi32>
    %244 = math.tanh %240 : vector<2x192xf32>
    %245 = arith.select %243, %244, %240 : vector<2x192xi1>, vector<2x192xf32>
    %246 = vector.extract_strided_slice %240 {offsets = [0, 0], sizes = [2, 64], strides = [1, 1]} : vector<2x192xf32> to vector<2x64xf32>
    %247 = vector.extract_strided_slice %240 {offsets = [0, 64], sizes = [2, 64], strides = [1, 1]} : vector<2x192xf32> to vector<2x64xf32>
    %cst_87 = arith.constant 5.000000e-01 : f32
    %248 = vector.broadcast %cst_87 : f32 to vector<2x64xf32>
    %249 = arith.mulf %248, %247 : vector<2x64xf32>
    %250 = math.exp %249 : vector<2x64xf32>
    %251 = arith.mulf %250, %237 : vector<2x64xf32>
    %252 = arith.addf %246, %251 : vector<2x64xf32>
    %253 = tpu.concatenate %228, %235 in 1 : vector<2x192xf32>, vector<2x64xf32> -> vector<2x256xf32>
    %c1_88 = arith.constant 1 : index
    %c0_89 = arith.constant 0 : index
    %c0_90 = arith.constant 0 : index
    %254 = vector.load %arg7[%c1_88, %c0_89, %c0_90] : memref<2x2x256xf32, #tpu.memory_space<vmem>>, vector<1x2x256xf32>
    %255 = vector.shape_cast %254 : vector<1x2x256xf32> to vector<2x256xf32>
    %256 = vector.shape_cast %253 : vector<2x256xf32> to vector<1x2x256xf32>
    tpu.vector_store %arg7[%c1_88, %c0_89, %c0_90], %256 {strides = array<i32>} : memref<2x2x256xf32, #tpu.memory_space<vmem>>, vector<1x2x256xf32>,
    %257 = tpu.concatenate %245, %252 in 1 : vector<2x192xf32>, vector<2x64xf32> -> vector<2x256xf32>
    %c1_91 = arith.constant 1 : index
    %c0_92 = arith.constant 0 : index
    %c0_93 = arith.constant 0 : index
    %258 = vector.load %arg8[%c1_91, %c0_92, %c0_93] : memref<2x2x256xf32, #tpu.memory_space<vmem>>, vector<1x2x256xf32>
    %259 = vector.shape_cast %258 : vector<1x2x256xf32> to vector<2x256xf32>
    %260 = vector.shape_cast %257 : vector<2x256xf32> to vector<1x2x256xf32>
    tpu.vector_store %arg8[%c1_91, %c0_92, %c0_93], %260 {strides = array<i32>} : memref<2x2x256xf32, #tpu.memory_space<vmem>>, vector<1x2x256xf32>,
    %c0_94 = arith.constant 0 : index
    %c0_95 = arith.constant 0 : index
    %261 = vector.load %arg5[%c0_94, %c0_95] : memref<72x128xf32, #tpu.memory_space<vmem>>, vector<64x128xf32>
    %c64_96 = arith.constant 64 : index
    %c0_97 = arith.constant 0 : index
    %262 = vector.load %arg5[%c64_96, %c0_97] : memref<72x128xf32, #tpu.memory_space<vmem>>, vector<1x128xf32>
    %cst_98 = arith.constant dense<0.000000e+00> : vector<2x128xf32>
    %263 = tpu.matmul %252, %261, %cst_98 {dimension_numbers = #tpu.dot_dimension_numbers<[1], [0], [0], [1], [0, 0, 1, 1], [], []>} : vector<2x64xf32>, vector<64x128xf32>, vector<2x128xf32> -> vector<2x128xf32>
    %264 = vector.broadcast %262 : vector<1x128xf32> to vector<2x128xf32>
    %265 = arith.addf %263, %264 : vector<2x128xf32>
    %266 = tpu.iota {dimensions = array<i32: 1>} : vector<2x128xi32>
    %c12_i32 = arith.constant 12 : i32
    %c0_i32_99 = arith.constant 0 : i32
    %267 = arith.cmpi eq, %c12_i32, %c0_i32_99 : i32
    %c1_i32_100 = arith.constant 1 : i32
    %268 = arith.select %267, %c1_i32_100, %c12_i32 : i32
    %269 = vector.broadcast %268 : i32 to vector<2x128xi32>
    %270 = arith.remsi %266, %269 : vector<2x128xi32>
    %c0_i32_101 = arith.constant 0 : i32
    %271 = vector.broadcast %c0_i32_101 : i32 to vector<2x128xi32>
    %272 = arith.cmpi ne, %270, %271 : vector<2x128xi32>
    %c0_i32_102 = arith.constant 0 : i32
    %273 = vector.broadcast %c0_i32_102 : i32 to vector<2x128xi32>
    %274 = arith.cmpi slt, %270, %273 : vector<2x128xi32>
    %c0_i32_103 = arith.constant 0 : i32
    %275 = arith.cmpi slt, %268, %c0_i32_103 : i32
    %276 = vector.broadcast %275 : i1 to vector<2x128xi1>
    %277 = vector.broadcast %276 : vector<2x128xi1> to vector<2x128xi1>
    %278 = arith.xori %274, %277 : vector<2x128xi1>
    %279 = arith.andi %278, %272 : vector<2x128xi1>
    %280 = vector.broadcast %268 : i32 to vector<2x128xi32>
    %281 = arith.addi %270, %280 : vector<2x128xi32>
    %282 = arith.select %279, %281, %270 : vector<2x128xi1>, vector<2x128xi32>
    %c0_i32_104 = arith.constant 0 : i32
    %283 = vector.broadcast %c0_i32_104 : i32 to vector<2x128xi32>
    %284 = arith.cmpi eq, %282, %283 : vector<2x128xi32>
    %c96_i32 = arith.constant 96 : i32
    %285 = vector.broadcast %c96_i32 : i32 to vector<2x128xi32>
    %286 = arith.cmpi sge, %266, %285 : vector<2x128xi32>
    %287 = arith.ori %284, %286 : vector<2x128xi1>
    %cst_105 = arith.constant 0.000000e+00 : f32
    %288 = vector.broadcast %cst_105 : f32 to vector<2x128xf32>
    %289 = arith.maximumf %265, %288 : vector<2x128xf32>
    %290 = vector.broadcast %cst_105 : f32 to vector<2x128xf32>
    %291 = arith.subf %265, %290 : vector<2x128xf32>
    %292 = arith.cmpf one, %291, %291 : vector<2x128xf32>
    %293 = vector.broadcast %cst_105 : f32 to vector<2x128xf32>
    %294 = arith.addf %265, %293 : vector<2x128xf32>
    %295 = math.absf %291 : vector<2x128xf32>
    %cst_106 = arith.constant 0.000000e+00 : f32
    %296 = vector.broadcast %cst_106 : f32 to vector<2x128xf32>
    %297 = arith.subf %296, %295 : vector<2x128xf32>
    %298 = math.exp %297 : vector<2x128xf32>
    %299 = math.log1p %298 : vector<2x128xf32>
    %300 = arith.addf %289, %299 : vector<2x128xf32>
    %301 = arith.select %292, %294, %300 : vector<2x128xi1>, vector<2x128xf32>
    %302 = arith.select %287, %265, %301 : vector<2x128xi1>, vector<2x128xf32>
    %c0_107 = arith.constant 0 : index
    %c0_108 = arith.constant 0 : index
    %303 = vector.load %arg9[%c0_107, %c0_108] : memref<2x128xf32, #tpu.memory_space<vmem>>, vector<2x128xf32>
    tpu.vector_store %arg9[%c0_107, %c0_108], %302 {strides = array<i32>} : memref<2x128xf32, #tpu.memory_space<vmem>>, vector<2x128xf32>,
    return
  }
}

</mosaic_0001>

<llo_original>
// kernel: _lambda_.1
$region0: #{_lambda_.1}
  #allocation0 [shape = 'u32[]', space=smem, size = 0x4, offset = 0x4, fixed_abs, tag = 'smem constant byte address 0x4 - core index']
  #allocation1 [shape = 'u32[72,128]{1,0:T(1,128)}', space=vmem, size = 0x9000, scoped, tag = 'internal scratch']
  %s0 = inlined_call_operand.vmem [shape: f32[16,2], index: 0, kind: input, shape index: {}]
  %s1 = inlined_call_operand.vmem [shape: f32[8,2], index: 1, kind: input, shape index: {}]
  %s2 = inlined_call_operand.vmem [shape: f32[80,32], index: 2, kind: input, shape index: {}]
  %s3 = inlined_call_operand.vmem [shape: f32[144,192], index: 3, kind: input, shape index: {}]
  %s4 = inlined_call_operand.vmem [shape: f32[144,64], index: 4, kind: input, shape index: {}]
  %s5 = inlined_call_operand.vmem [shape: f32[72,128], index: 5, kind: input, shape index: {}]
  %s6 = inlined_call_operand.vmem [shape: f32[4,2,64], index: 6, kind: input, shape index: {}]
  %s7 = inlined_call_operand.vmem [shape: f32[2,2,256], index: 7, kind: output, shape index: {0}]
  %s8 = inlined_call_operand.vmem [shape: f32[2,2,256], index: 8, kind: output, shape index: {1}]
  %s9 = inlined_call_operand.vmem [shape: f32[2,128], index: 9, kind: output, shape index: {2}]
  %10 = xla_tuple %s7, %s8, %s9
  %s11 = sld [smem:[#allocation0]]
  $region54: #{_lambda_.1} parent=0
    _
  %s13 = ssub.s32 1, %s11
  %s14 = scalar_select 0, %s13, %s11
  // Predicated region
  $region2: #{_lambda_.1} parent=0 // pred_check
    _
  $region3: #{_lambda_.1} parent=0 // pred_check_branch
    %16 = sbr.rel (0) target = $region5
  $region4: #{_lambda_.1} parent=0 // pred_region
    _
  $region5: #{_lambda_.1} parent=0 // pred_fallthru
    _
  // Predicated region
  $region6: #{_lambda_.1} parent=0 // pred_check
    _
  $region7: #{_lambda_.1} parent=0 // pred_check_branch
    %18 = sbr.rel (0) target = $region9
  $region8: #{_lambda_.1} parent=0 // pred_region
    _
  $region9: #{_lambda_.1} parent=0 // pred_fallthru
    _
  // Predicated region
  $region10: #{_lambda_.1} parent=0 // pred_check
    _
  $region11: #{_lambda_.1} parent=0 // pred_check_branch
    %20 = sbr.rel (0) target = $region13
  $region12: #{_lambda_.1} parent=0 // pred_region
    _
  $region13: #{_lambda_.1} parent=0 // pred_fallthru
    _
  // Predicated region
  $region14: #{_lambda_.1} parent=0 // pred_check
    _
  $region15: #{_lambda_.1} parent=0 // pred_check_branch
    %22 = sbr.rel (0) target = $region17
  $region16: #{_lambda_.1} parent=0 // pred_region
    _
  $region17: #{_lambda_.1} parent=0 // pred_fallthru
    _
  // Predicated region
  $region18: #{_lambda_.1} parent=0 // pred_check
    _
  $region19: #{_lambda_.1} parent=0 // pred_check_branch
    %24 = sbr.rel (0) target = $region21
  $region20: #{_lambda_.1} parent=0 // pred_region
    _
  $region21: #{_lambda_.1} parent=0 // pred_fallthru
    _
  // Predicated region
  $region22: #{_lambda_.1} parent=0 // pred_check
    _
  $region23: #{_lambda_.1} parent=0 // pred_check_branch
    %26 = sbr.rel (0) target = $region25
  $region24: #{_lambda_.1} parent=0 // pred_region
    _
  $region25: #{_lambda_.1} parent=0 // pred_fallthru
    _
  // Predicated region
  $region26: #{_lambda_.1} parent=0 // pred_check
    _
  $region27: #{_lambda_.1} parent=0 // pred_check_branch
    %28 = sbr.rel (0) target = $region29
  $region28: #{_lambda_.1} parent=0 // pred_region
    _
  $region29: #{_lambda_.1} parent=0 // pred_fallthru
    _
  %v29 = vld [vmem:[%s0] sm:$0xff]
  %v30 = vld [vmem:[%s0 + $0x8] sm:$0xff]
  %v31 = vld [vmem:[%s2] sm:$0x3]
  %v32 = vld [vmem:[%s2 + $0x8] sm:$0x1]
  %v33 = vld [vmem:[%s2 + $0x10] sm:$0xff]
  %v34 = vld [vmem:[%s2 + $0x18] sm:$0x1]
  %v35 = vld [vmem:[%s2 + $0x20] sm:$0x1]
  %37 = vset.pattern.permute.xlu0 0
  %38 = vperm.xlu0 %37, %v29
  %v39 = vpop.permute.xlu0 %38
  %42 = vset.pattern.permute.xlu0 0
  %43 = vperm.xlu0 %42, %v30
  %v44 = vpop.permute.xlu0 %43
  %v46 = vperm.slane %v31, 0
  %v47 = vmul.f32 %v39, %v46
  %v48 = vmul.f32 %v44, %v46
  %v49 = vperm.slane %v32, 0
  %v50 = vadd.f32 %v49, %v47
  %v51 = vadd.f32 %v49, %v48
  %52 = vset.pattern.permute.xlu0 1
  %53 = vperm.xlu0 %52, %v29
  %v54 = vpop.permute.xlu0 %53
  %56 = vset.pattern.permute.xlu0 1
  %57 = vperm.xlu0 %56, %v30
  %v58 = vpop.permute.xlu0 %57
  %v60 = vperm.slane %v31, 1
  %v61 = vmul.f32 %v54, %v60
  %v62 = vmul.f32 %v58, %v60
  %v63 = vadd.f32 %v50, %v61
  %v64 = vadd.f32 %v51, %v62
  %v65 = vlaneseq
  %v66 = vshrl.u32 %v65, 7
  %v67 = vadd.s32 %v66, 8
  %v68 = vlaneseq
  %v69 = vand.u32 %v68, 127
  %vm70 = vcmp.lt.s32.totalorder %v66, 0
  %v71 = vsub.s32 0, %v66
  %v72 = vsel %vm70, %v71, %v66
  %v73 = vshrl.u32 %v72, 3
  %v74 = vand.u32 %v72, 7
  %v75 = vsub.s32 0, %v74
  %v76 = vsel %vm70, %v75, %v74
  %vm77 = vcmp.lt.s32.totalorder %v67, 0
  %v78 = vsub.s32 0, %v67
  %v79 = vsel %vm77, %v78, %v67
  %v80 = vshrl.u32 %v79, 3
  %v81 = vand.u32 %v79, 7
  %v82 = vsub.s32 0, %v81
  %v83 = vsel %vm77, %v82, %v81
  %vm84 = vcmp.ne.s32.totalorder %v76, 0
  %vm85 = vcmp.ne.s32.totalorder %v83, 0
  %vm86 = vcmp.lt.s32.totalorder %v76, 0
  %vm87 = vcmp.lt.s32.totalorder %v83, 0
  %vm88 = vmand %vm86, %vm84
  %vm89 = vmand %vm87, %vm85
  %v90 = vadd.s32 %v76, 8
  %v91 = vadd.s32 %v83, 8
  %v92 = vsel %vm88, %v90, %v76
  %v93 = vsel %vm89, %v91, %v83
  %vm94 = vcmp.eq.s32.totalorder %v92, %v69
  %vm95 = vcmp.eq.s32.totalorder %v93, %v69
  %v96 = vsel %vm94, 1, 0
  %v97 = vsel %vm95, 1, 0
  %v98 = vcvt.s32.f32 %v96
  %v99 = vcvt.s32.f32 %v97
  %vm100 = vcmask 64512
  %v102 = vsel %vm100, %v98, 0
  %v105 = vsel %vm100, %v99, 0
  %107 = vmatpush.msra.mxu0 0.0
  %108 = vmatpush.msra.mxu0 0.0
  %109 = vmatpush.msra.mxu0 0.0
  %110 = vmatpush.msra.mxu0 0.0
  %111 = vmatpush.msra.mxu0 0.0
  %112 = vmatpush.msra.mxu0 0.0
  %113 = vmatpush.msra.mxu0 0.0
  %114 = vmatpush.msra.mxu0 0.0
  %115 = vmatpush.msra.mxu0 0.0
  %116 = vmatpush.msra.mxu0 0.0
  %117 = vmatpush.msra.mxu0 0.0
  %118 = vmatpush.msra.mxu0 0.0
  %119 = vmatpush.msra.mxu0 0.0
  %120 = vmatpush.msra.mxu0 0.0
  %121 = vmatpush.msra.mxu0 0.0
  %122 = vmatpush.msra.mxu0 %v33
  %123 = vmatmul.f32.gmra.mxu0 %v102
  %v124 = vpop.f32.mrf.mxu0
  %v125 = vadd.f32 0.0, %v124
  %126 = vmatmul.f32.gmra.mxu0 %v105
  %v127 = vpop.f32.mrf.mxu0
  %v128 = vadd.f32 0.0, %v127
  %129 = vdwg.mxu0
  %v130 = vadd.f32 %v63, %v125
  %v131 = vadd.f32 %v64, %v128
  %vm132 = vcmask 261120
  %v133 = vsel %vm132, %v130, 0.0
  %134 = vadd.xlane.f32.xlu0 %v133
  %v135 = vpop.xlane.xlu0 %134
  %v136 = vsel %vm132, %v131, 0.0
  %137 = vadd.xlane.f32.xlu0 %v136
  %v138 = vpop.xlane.xlu0 %137
  %v139 = vrcp.pop 32.0
  %v140 = vmul.f32 32.0, %v139
  %v141 = vsub.f32 1.0, %v140
  %v142 = vmul.f32 %v139, %v141
  %v143 = vadd.f32 %v139, %v142
  %vm144 = vweird.f32 %v139
  %v145 = vsel %vm144, %v139, %v143
  %v146 = vmul.f32 %v135, %v145
  %v147 = vmul.f32 %v138, %v145
  %v148 = vsub.f32 %v130, %v146
  %v149 = vsub.f32 %v131, %v147
  %v150 = vmul.f32 %v148, %v148
  %v151 = vmul.f32 %v149, %v149
  %v152 = vsel %vm132, %v150, 0.0
  %153 = vadd.xlane.f32.xlu0 %v152
  %v154 = vpop.xlane.xlu0 %153
  %v155 = vsel %vm132, %v151, 0.0
  %156 = vadd.xlane.f32.xlu0 %v155
  %v157 = vpop.xlane.xlu0 %156
  %v158 = vmul.f32 %v154, %v145
  %v159 = vmul.f32 %v157, %v145
  %v160 = vadd.f32 %v158, 1e-05
  %v161 = vadd.f32 %v159, 1e-05
  %v162 = vrsqrt.pop %v160
  %v163 = vmul.f32 %v162, %v160
  %v164 = vmul.f32 %v163, %v162
  %v165 = vmul.f32 0.5, %v164
  %v166 = vsub.f32 1.5, %v165
  %v167 = vmul.f32 %v162, %v166
  %vm168 = vweird.f32 %v160
  %vm169 = vweird.f32 %v162
  %vm170 = vmor %vm168, %vm169
  %v171 = vsel %vm170, %v162, %v167
  %v172 = vrsqrt.pop %v161
  %v173 = vmul.f32 %v172, %v161
  %v174 = vmul.f32 %v173, %v172
  %v175 = vmul.f32 0.5, %v174
  %v176 = vsub.f32 1.5, %v175
  %v177 = vmul.f32 %v172, %v176
  %vm178 = vweird.f32 %v161
  %vm179 = vweird.f32 %v172
  %vm180 = vmor %vm178, %vm179
  %v181 = vsel %vm180, %v172, %v177
  %v182 = vmul.f32 %v148, %v171
  %v183 = vmul.f32 %v149, %v181
  %v184 = vperm.slane %v34, 0
  %v185 = vmul.f32 %v182, %v184
  %v186 = vmul.f32 %v183, %v184
  %v187 = vperm.slane %v35, 0
  %v188 = vadd.f32 %v185, %v187
  %v189 = vadd.f32 %v186, %v187
  %v190 = vmul.u32 %v66, 8
  %vm191 = vcmp.ge.s32.totalorder %v69, %v190
  %v192 = vadd.s32 %v66, 1
  %v193 = vmul.u32 %v192, 8
  %vm194 = vcmp.lt.s32.totalorder %v69, %v193
  %vm195 = vmand %vm191, %vm194
  %v196 = vsel %vm195, 0.125, 0.0
  %vm197 = vcmask 130048
  %v199 = vsel %vm197, %v196, 0
  %201 = vmatpush.msra.mxu0 0.0
  %202 = vmatpush.msra.mxu0 0.0
  %203 = vmatpush.msra.mxu0 0.0
  %204 = vmatpush.msra.mxu0 0.0
  %205 = vmatpush.msra.mxu0 0.0
  %206 = vmatpush.msra.mxu0 0.0
  %207 = vmatpush.msra.mxu0 0.0
  %208 = vmatpush.msra.mxu0 0.0
  %209 = vmatpush.msra.mxu0 0.0
  %210 = vmatpush.msra.mxu0 0.0
  %211 = vmatpush.msra.mxu0 0.0
  %212 = vmatpush.msra.mxu0 0.0
  %213 = vmatpush.msra.mxu0 0.0
  %214 = vmatpush.msra.mxu0 0.0
  %215 = vmatpush.msra.mxu0 %v189
  %216 = vmatpush.msra.mxu0 %v188
  %217 = vmatmul.f32.gmra.mxu0 %v199
  %v218 = vpop.f32.mrf.mxu0
  %v219 = vadd.f32 0.0, %v218
  %220 = vdwg.mxu0
  %v221 = vld [vmem:[%s1] sm:$0xff]
  %v222 = vld [vmem:[%s2 + $0x28] sm:$0x3]
  %v223 = vld [vmem:[%s2 + $0x30] sm:$0x1]
  %v224 = vld [vmem:[%s2 + $0x38] sm:$0xf]
  %v225 = vld [vmem:[%s2 + $0x40] sm:$0x1]
  %v226 = vld [vmem:[%s2 + $0x48] sm:$0x1]
  %228 = vset.pattern.permute.xlu0 0
  %229 = vperm.xlu0 %228, %v221
  %v230 = vpop.permute.xlu0 %229
  %v232 = vperm.slane %v222, 0
  %v233 = vmul.f32 %v230, %v232
  %v234 = vperm.slane %v223, 0
  %v235 = vadd.f32 %v234, %v233
  %236 = vset.pattern.permute.xlu0 1
  %237 = vperm.xlu0 %236, %v221
  %v238 = vpop.permute.xlu0 %237
  %v240 = vperm.slane %v222, 1
  %v241 = vmul.f32 %v238, %v240
  %v242 = vadd.f32 %v235, %v241
  %vm243 = vcmp.lt.s32.totalorder %v66, 0
  %v244 = vsub.s32 0, %v66
  %v245 = vsel %vm243, %v244, %v66
  %v246 = vshrl.u32 %v245, 2
  %v247 = vand.u32 %v245, 3
  %v248 = vsub.s32 0, %v247
  %v249 = vsel %vm243, %v248, %v247
  %vm250 = vcmp.ne.s32.totalorder %v249, 0
  %vm251 = vcmp.lt.s32.totalorder %v249, 0
  %vm252 = vmand %vm251, %vm250
  %v253 = vadd.s32 %v249, 4
  %v254 = vsel %vm252, %v253, %v249
  %vm255 = vcmp.eq.s32.totalorder %v254, %v69
  %v256 = vsel %vm255, 1, 0
  %v257 = vcvt.s32.f32 %v256
  %vm258 = vcmask 31744
  %v260 = vsel %vm258, %v257, 0
  %vm262 = vcmask 1043456
  %v264 = vsel %vm262, %v224, 0
  %266 = vmatpush.msra.mxu0 0.0
  %267 = vmatpush.msra.mxu0 0.0
  %268 = vmatpush.msra.mxu0 0.0
  %269 = vmatpush.msra.mxu0 0.0
  %270 = vmatpush.msra.mxu0 0.0
  %271 = vmatpush.msra.mxu0 0.0
  %272 = vmatpush.msra.mxu0 0.0
  %273 = vmatpush.msra.mxu0 0.0
  %274 = vmatpush.msra.mxu0 0.0
  %275 = vmatpush.msra.mxu0 0.0
  %276 = vmatpush.msra.mxu0 0.0
  %277 = vmatpush.msra.mxu0 0.0
  %278 = vmatpush.msra.mxu0 0.0
  %279 = vmatpush.msra.mxu0 0.0
  %280 = vmatpush.msra.mxu0 0.0
  %281 = vmatpush.msra.mxu0 %v264
  %282 = vmatmul.f32.gmra.mxu0 %v260
  %v283 = vpop.f32.mrf.mxu0
  %v284 = vadd.f32 0.0, %v283
  %285 = vdwg.mxu0
  %v286 = vadd.f32 %v242, %v284
  %v287 = vsel %vm132, %v286, 0.0
  %288 = vadd.xlane.f32.xlu0 %v287
  %v289 = vpop.xlane.xlu0 %288
  %v290 = vmul.f32 %v289, %v145
  %v291 = vsub.f32 %v286, %v290
  %v292 = vmul.f32 %v291, %v291
  %v293 = vsel %vm132, %v292, 0.0
  %294 = vadd.xlane.f32.xlu0 %v293
  %v295 = vpop.xlane.xlu0 %294
  %v296 = vmul.f32 %v295, %v145
  %v297 = vadd.f32 %v296, 1e-05
  %v298 = vrsqrt.pop %v297
  %v299 = vmul.f32 %v298, %v297
  %v300 = vmul.f32 %v299, %v298
  %v301 = vmul.f32 0.5, %v300
  %v302 = vsub.f32 1.5, %v301
  %v303 = vmul.f32 %v298, %v302
  %vm304 = vweird.f32 %v297
  %vm305 = vweird.f32 %v298
  %vm306 = vmor %vm304, %vm305
  %v307 = vsel %vm306, %v298, %v303
  %v308 = vmul.f32 %v291, %v307
  %v309 = vperm.slane %v225, 0
  %v310 = vmul.f32 %v308, %v309
  %v311 = vperm.slane %v226, 0
  %v312 = vadd.f32 %v310, %v311
  %v313 = vmul.u32 %v66, 4
  %vm314 = vcmp.ge.s32.totalorder %v69, %v313
  %v315 = vmul.u32 %v192, 4
  %vm316 = vcmp.lt.s32.totalorder %v69, %v315
  %vm317 = vmand %vm314, %vm316
  %v318 = vsel %vm317, 0.25, 0.0
  %v320 = vsel %vm100, %v318, 0
  %322 = vmatpush.msra.mxu0 0.0
  %323 = vmatpush.msra.mxu0 0.0
  %324 = vmatpush.msra.mxu0 0.0
  %325 = vmatpush.msra.mxu0 0.0
  %326 = vmatpush.msra.mxu0 0.0
  %327 = vmatpush.msra.mxu0 0.0
  %328 = vmatpush.msra.mxu0 0.0
  %329 = vmatpush.msra.mxu0 0.0
  %330 = vmatpush.msra.mxu0 0.0
  %331 = vmatpush.msra.mxu0 0.0
  %332 = vmatpush.msra.mxu0 0.0
  %333 = vmatpush.msra.mxu0 0.0
  %334 = vmatpush.msra.mxu0 0.0
  %335 = vmatpush.msra.mxu0 0.0
  %336 = vmatpush.msra.mxu0 0.0
  %337 = vmatpush.msra.mxu0 %v312
  %338 = vmatmul.f32.gmra.mxu0 %v320
  %v339 = vpop.f32.mrf.mxu0
  %v340 = vadd.f32 0.0, %v339
  %341 = vdwg.mxu0
  %343 = vrot.lane.b32.xlu0 %v340, 32
  %v344 = vpop.permute.xlu0 %343
  %v346 = vsel %vm132, %v219, %v344
  %v347 = vld [vmem:[%s3] sm:$0xff]
  %v348 = vld [vmem:[%s3 + $0x8] sm:$0xff]
  %v349 = vld [vmem:[%s3 + $0x10] sm:$0xff]
  %v350 = vld [vmem:[%s3 + $0x18] sm:$0xff]
  %v351 = vld [vmem:[%s3 + $0x20] sm:$0xff]
  %v352 = vld [vmem:[%s3 + $0x28] sm:$0xff]
  %v353 = vld [vmem:[%s3 + $0x30] sm:$0xff]
  %v354 = vld [vmem:[%s3 + $0x38] sm:$0xff]
  %v355 = vld [vmem:[%s3 + $0x40] sm:$0xff]
  %v356 = vld [vmem:[%s3 + $0x48] sm:$0xff]
  %v357 = vld [vmem:[%s3 + $0x50] sm:$0xff]
  %v358 = vld [vmem:[%s3 + $0x58] sm:$0xff]
  %v359 = vld [vmem:[%s3 + $0x60] sm:$0xff]
  %v360 = vld [vmem:[%s3 + $0x68] sm:$0xff]
  %v361 = vld [vmem:[%s3 + $0x70] sm:$0xff]
  %v362 = vld [vmem:[%s3 + $0x78] sm:$0xff]
  %s363 = scalar_lea.vmem %s3, 128
  %v364 = vld [vmem:[%s363] ss:$8 sm:$0x3]
  %v365 = vld [vmem:[%s3 + $0x90] sm:$0xff]
  %v366 = vld [vmem:[%s3 + $0x98] sm:$0xff]
  %v367 = vld [vmem:[%s3 + $0xa0] sm:$0xff]
  %v368 = vld [vmem:[%s3 + $0xa8] sm:$0xff]
  %v369 = vld [vmem:[%s3 + $0xb0] sm:$0xff]
  %v370 = vld [vmem:[%s3 + $0xb8] sm:$0xff]
  %v371 = vld [vmem:[%s3 + $0xc0] sm:$0xff]
  %v372 = vld [vmem:[%s3 + $0xc8] sm:$0xff]
  %v373 = vld [vmem:[%s3 + $0xd0] sm:$0xff]
  %v374 = vld [vmem:[%s3 + $0xd8] sm:$0xff]
  %v375 = vld [vmem:[%s3 + $0xe0] sm:$0xff]
  %v376 = vld [vmem:[%s3 + $0xe8] sm:$0xff]
  %v377 = vld [vmem:[%s3 + $0xf0] sm:$0xff]
  %v378 = vld [vmem:[%s3 + $0xf8] sm:$0xff]
  %v379 = vld [vmem:[%s3 + $0x100] sm:$0xff]
  %v380 = vld [vmem:[%s3 + $0x108] sm:$0xff]
  %s381 = scalar_lea.vmem %s3, 272
  %v382 = vld [vmem:[%s381] ss:$8 sm:$0x3]
  %v383 = vld [vmem:[%s4] sm:$0xff]
  %v384 = vld [vmem:[%s4 + $0x8] sm:$0xff]
  %v385 = vld [vmem:[%s4 + $0x10] sm:$0xff]
  %v386 = vld [vmem:[%s4 + $0x18] sm:$0xff]
  %v387 = vld [vmem:[%s4 + $0x20] sm:$0xff]
  %v388 = vld [vmem:[%s4 + $0x28] sm:$0xff]
  %v389 = vld [vmem:[%s4 + $0x30] sm:$0xff]
  %v390 = vld [vmem:[%s4 + $0x38] sm:$0xff]
  %v391 = vld [vmem:[%s4 + $0x40] sm:$0x1]
  %v392 = vld [vmem:[%s4 + $0x48] sm:$0xff]
  %v393 = vld [vmem:[%s4 + $0x50] sm:$0xff]
  %v394 = vld [vmem:[%s4 + $0x58] sm:$0xff]
  %v395 = vld [vmem:[%s4 + $0x60] sm:$0xff]
  %v396 = vld [vmem:[%s4 + $0x68] sm:$0xff]
  %v397 = vld [vmem:[%s4 + $0x70] sm:$0xff]
  %v398 = vld [vmem:[%s4 + $0x78] sm:$0xff]
  %v399 = vld [vmem:[%s4 + $0x80] sm:$0xff]
  %v400 = vld [vmem:[%s4 + $0x88] sm:$0x1]
  %v401 = vld [vmem:[%s6] sm:$0x3]
  %v403 = vperm.slane %v364, 0
  %v404 = vperm.slane %v364, 1
  %vm407 = vcmask 523264
  %v409 = vsel %vm407, %v346, 0
  %411 = vmatpush.msra.mxu0 0.0
  %412 = vmatpush.msra.mxu0 0.0
  %413 = vmatpush.msra.mxu0 0.0
  %414 = vmatpush.msra.mxu0 0.0
  %415 = vmatpush.msra.mxu0 0.0
  %416 = vmatpush.msra.mxu0 0.0
  %417 = vmatpush.msra.mxu0 0.0
  %418 = vmatpush.msra.mxu0 0.0
  %419 = vmatpush.msra.mxu0 %v361
  %420 = vmatpush.msra.mxu0 %v359
  %421 = vmatpush.msra.mxu0 %v357
  %422 = vmatpush.msra.mxu0 %v355
  %423 = vmatpush.msra.mxu0 %v353
  %424 = vmatpush.msra.mxu0 %v351
  %425 = vmatpush.msra.mxu0 %v349
  %426 = vmatpush.msra.mxu0 %v347
  %427 = vmatmul.f32.gmra.mxu0 %v409
  %v428 = vpop.f32.mrf.mxu0
  %v429 = vadd.f32 %v403, %v428
  %430 = vdwg.mxu0
  %431 = vmatpush.msra.mxu0 0.0
  %432 = vmatpush.msra.mxu0 0.0
  %433 = vmatpush.msra.mxu0 0.0
  %434 = vmatpush.msra.mxu0 0.0
  %435 = vmatpush.msra.mxu0 0.0
  %436 = vmatpush.msra.mxu0 0.0
  %437 = vmatpush.msra.mxu0 0.0
  %438 = vmatpush.msra.mxu0 0.0
  %439 = vmatpush.msra.mxu0 %v362
  %440 = vmatpush.msra.mxu0 %v360
  %441 = vmatpush.msra.mxu0 %v358
  %442 = vmatpush.msra.mxu0 %v356
  %443 = vmatpush.msra.mxu0 %v354
  %444 = vmatpush.msra.mxu0 %v352
  %445 = vmatpush.msra.mxu0 %v350
  %446 = vmatpush.msra.mxu0 %v348
  %447 = vmatmul.f32.gmra.mxu0 %v409
  %v448 = vpop.f32.mrf.mxu0
  %v449 = vadd.f32 %v404, %v448
  %450 = vdwg.mxu0
  %v451 = vadd.s32 %v69, 128
  %vm452 = vcmp.ge.s32.totalorder %v69, 128
  %vm453 = vcmp.ge.s32.totalorder %v451, 128
  %v454 = vtanh.pop %v429
  %v455 = vtanh.pop %v449
  %v456 = vsel %vm452, %v454, %v429
  %v457 = vsel %vm453, %v455, %v449
  %v458 = vmul.f32 %v429, 0.5
  %v459 = vmul.f32 %v458, 1.442695
  %v460 = vpow.pop %v459
  %462 = vrot.lane.b32.xlu0 %v401, 64
  %v463 = vpop.permute.xlu0 %462
  %v465 = vmul.f32 %v460, %v463
  %467 = vrot.lane.b32.xlu0 %v465, 64
  %v468 = vpop.permute.xlu0 %467
  %v470 = vadd.f32 %v429, %v468
  %s471 = scalar_lea.vmem %s6, 2
  %v472 = vld [vmem:[%s471] sm:$0x3]
  %v474 = vperm.slane %v382, 0
  %v475 = vperm.slane %v382, 1
  %478 = vmatpush.msra.mxu0 0.0
  %479 = vmatpush.msra.mxu0 0.0
  %480 = vmatpush.msra.mxu0 0.0
  %481 = vmatpush.msra.mxu0 0.0
  %482 = vmatpush.msra.mxu0 0.0
  %483 = vmatpush.msra.mxu0 0.0
  %484 = vmatpush.msra.mxu0 0.0
  %485 = vmatpush.msra.mxu0 0.0
  %486 = vmatpush.msra.mxu0 %v379
  %487 = vmatpush.msra.mxu0 %v377
  %488 = vmatpush.msra.mxu0 %v375
  %489 = vmatpush.msra.mxu0 %v373
  %490 = vmatpush.msra.mxu0 %v371
  %491 = vmatpush.msra.mxu0 %v369
  %492 = vmatpush.msra.mxu0 %v367
  %493 = vmatpush.msra.mxu0 %v365
  %494 = vmatmul.f32.gmra.mxu0 %v409
  %v495 = vpop.f32.mrf.mxu0
  %v496 = vadd.f32 %v474, %v495
  %497 = vdwg.mxu0
  %498 = vmatpush.msra.mxu0 0.0
  %499 = vmatpush.msra.mxu0 0.0
  %500 = vmatpush.msra.mxu0 0.0
  %501 = vmatpush.msra.mxu0 0.0
  %502 = vmatpush.msra.mxu0 0.0
  %503 = vmatpush.msra.mxu0 0.0
  %504 = vmatpush.msra.mxu0 0.0
  %505 = vmatpush.msra.mxu0 0.0
  %506 = vmatpush.msra.mxu0 %v380
  %507 = vmatpush.msra.mxu0 %v378
  %508 = vmatpush.msra.mxu0 %v376
  %509 = vmatpush.msra.mxu0 %v374
  %510 = vmatpush.msra.mxu0 %v372
  %511 = vmatpush.msra.mxu0 %v370
  %512 = vmatpush.msra.mxu0 %v368
  %513 = vmatpush.msra.mxu0 %v366
  %514 = vmatmul.f32.gmra.mxu0 %v409
  %v515 = vpop.f32.mrf.mxu0
  %v516 = vadd.f32 %v475, %v515
  %517 = vdwg.mxu0
  %v518 = vtanh.pop %v496
  %v519 = vtanh.pop %v516
  %v520 = vsel %vm452, %v518, %v496
  %v521 = vsel %vm453, %v519, %v516
  %v522 = vmul.f32 %v496, 0.5
  %v523 = vmul.f32 %v522, 1.442695
  %v524 = vpow.pop %v523
  %526 = vrot.lane.b32.xlu0 %v472, 64
  %v527 = vpop.permute.xlu0 %526
  %v529 = vmul.f32 %v524, %v527
  %531 = vrot.lane.b32.xlu0 %v529, 64
  %v532 = vpop.permute.xlu0 %531
  %v534 = vadd.f32 %v496, %v532
  %536 = vrot.lane.b32.xlu0 %v470, 64
  %v537 = vpop.permute.xlu0 %536
  %v539 = vsel %vm407, %v457, %v537
  %v542 = vrot.slane %v539, 6
  %vm543 = vcmask 1041408
  %v544 = vsel %vm543, %v456, %v542
  %546 = vst [vmem:[%s7] sm:$0xf] %v544
  %548 = vrot.lane.b32.xlu0 %v534, 64
  %v549 = vpop.permute.xlu0 %548
  %v551 = vsel %vm407, %v521, %v549
  %v554 = vrot.slane %v551, 6
  %v555 = vsel %vm543, %v520, %v554
  %557 = vst [vmem:[%s8] sm:$0xf] %v555
  %v559 = vsel %vm407, %v457, 0
  %561 = vmatpush.msra.mxu0 0.0
  %562 = vmatpush.msra.mxu0 0.0
  %563 = vmatpush.msra.mxu0 0.0
  %564 = vmatpush.msra.mxu0 0.0
  %565 = vmatpush.msra.mxu0 0.0
  %566 = vmatpush.msra.mxu0 0.0
  %567 = vmatpush.msra.mxu0 0.0
  %568 = vmatpush.msra.mxu0 0.0
  %569 = vmatpush.msra.mxu0 %v390
  %570 = vmatpush.msra.mxu0 %v389
  %571 = vmatpush.msra.mxu0 %v388
  %572 = vmatpush.msra.mxu0 %v387
  %573 = vmatpush.msra.mxu0 %v386
  %574 = vmatpush.msra.mxu0 %v385
  %575 = vmatpush.msra.mxu0 %v384
  %576 = vmatpush.msra.mxu0 %v383
  %577 = vmatmul.f32.gmra.mxu0 %v559
  %v578 = vpop.f32.mrf.mxu0
  %v579 = vadd.f32 0.0, %v578
  %580 = vdwg.mxu0
  %v581 = vadd.f32 %v346, %v579
  %v582 = vperm.slane %v391, 0
  %v583 = vadd.f32 %v581, %v582
  %v585 = vsel %vm407, %v521, 0
  %587 = vmatpush.msra.mxu0 0.0
  %588 = vmatpush.msra.mxu0 0.0
  %589 = vmatpush.msra.mxu0 0.0
  %590 = vmatpush.msra.mxu0 0.0
  %591 = vmatpush.msra.mxu0 0.0
  %592 = vmatpush.msra.mxu0 0.0
  %593 = vmatpush.msra.mxu0 0.0
  %594 = vmatpush.msra.mxu0 0.0
  %595 = vmatpush.msra.mxu0 %v399
  %596 = vmatpush.msra.mxu0 %v398
  %597 = vmatpush.msra.mxu0 %v397
  %598 = vmatpush.msra.mxu0 %v396
  %599 = vmatpush.msra.mxu0 %v395
  %600 = vmatpush.msra.mxu0 %v394
  %601 = vmatpush.msra.mxu0 %v393
  %602 = vmatpush.msra.mxu0 %v392
  %603 = vmatmul.f32.gmra.mxu0 %v585
  %v604 = vpop.f32.mrf.mxu0
  %v605 = vadd.f32 0.0, %v604
  %606 = vdwg.mxu0
  %v607 = vadd.f32 %v346, %v605
  %v608 = vperm.slane %v400, 0
  %v609 = vadd.f32 %v607, %v608
  %s610 = scalar_lea.vmem %s6, 4
  %v611 = vld [vmem:[%s610] sm:$0x3]
  %v613 = vsel %vm407, %v583, 0
  %615 = vmatpush.msra.mxu0 0.0
  %616 = vmatpush.msra.mxu0 0.0
  %617 = vmatpush.msra.mxu0 0.0
  %618 = vmatpush.msra.mxu0 0.0
  %619 = vmatpush.msra.mxu0 0.0
  %620 = vmatpush.msra.mxu0 0.0
  %621 = vmatpush.msra.mxu0 0.0
  %622 = vmatpush.msra.mxu0 0.0
  %623 = vmatpush.msra.mxu0 %v361
  %624 = vmatpush.msra.mxu0 %v359
  %625 = vmatpush.msra.mxu0 %v357
  %626 = vmatpush.msra.mxu0 %v355
  %627 = vmatpush.msra.mxu0 %v353
  %628 = vmatpush.msra.mxu0 %v351
  %629 = vmatpush.msra.mxu0 %v349
  %630 = vmatpush.msra.mxu0 %v347
  %631 = vmatmul.f32.gmra.mxu0 %v613
  %v632 = vpop.f32.mrf.mxu0
  %v633 = vadd.f32 %v403, %v632
  %634 = vdwg.mxu0
  %635 = vmatpush.msra.mxu0 0.0
  %636 = vmatpush.msra.mxu0 0.0
  %637 = vmatpush.msra.mxu0 0.0
  %638 = vmatpush.msra.mxu0 0.0
  %639 = vmatpush.msra.mxu0 0.0
  %640 = vmatpush.msra.mxu0 0.0
  %641 = vmatpush.msra.mxu0 0.0
  %642 = vmatpush.msra.mxu0 0.0
  %643 = vmatpush.msra.mxu0 %v362
  %644 = vmatpush.msra.mxu0 %v360
  %645 = vmatpush.msra.mxu0 %v358
  %646 = vmatpush.msra.mxu0 %v356
  %647 = vmatpush.msra.mxu0 %v354
  %648 = vmatpush.msra.mxu0 %v352
  %649 = vmatpush.msra.mxu0 %v350
  %650 = vmatpush.msra.mxu0 %v348
  %651 = vmatmul.f32.gmra.mxu0 %v613
  %v652 = vpop.f32.mrf.mxu0
  %v653 = vadd.f32 %v404, %v652
  %654 = vdwg.mxu0
  %v655 = vtanh.pop %v633
  %v656 = vtanh.pop %v653
  %v657 = vsel %vm452, %v655, %v633
  %v658 = vsel %vm453, %v656, %v653
  %v659 = vmul.f32 %v633, 0.5
  %v660 = vmul.f32 %v659, 1.442695
  %v661 = vpow.pop %v660
  %663 = vrot.lane.b32.xlu0 %v611, 64
  %v664 = vpop.permute.xlu0 %663
  %v666 = vmul.f32 %v661, %v664
  %668 = vrot.lane.b32.xlu0 %v666, 64
  %v669 = vpop.permute.xlu0 %668
  %v671 = vadd.f32 %v633, %v669
  %s672 = scalar_lea.vmem %s6, 6
  %v673 = vld [vmem:[%s672] sm:$0x3]
  %v675 = vsel %vm407, %v609, 0
  %677 = vmatpush.msra.mxu0 0.0
  %678 = vmatpush.msra.mxu0 0.0
  %679 = vmatpush.msra.mxu0 0.0
  %680 = vmatpush.msra.mxu0 0.0
  %681 = vmatpush.msra.mxu0 0.0
  %682 = vmatpush.msra.mxu0 0.0
  %683 = vmatpush.msra.mxu0 0.0
  %684 = vmatpush.msra.mxu0 0.0
  %685 = vmatpush.msra.mxu0 %v379
  %686 = vmatpush.msra.mxu0 %v377
  %687 = vmatpush.msra.mxu0 %v375
  %688 = vmatpush.msra.mxu0 %v373
  %689 = vmatpush.msra.mxu0 %v371
  %690 = vmatpush.msra.mxu0 %v369
  %691 = vmatpush.msra.mxu0 %v367
  %692 = vmatpush.msra.mxu0 %v365
  %693 = vmatmul.f32.gmra.mxu0 %v675
  %v694 = vpop.f32.mrf.mxu0
  %v695 = vadd.f32 %v474, %v694
  %696 = vdwg.mxu0
  %697 = vmatpush.msra.mxu0 0.0
  %698 = vmatpush.msra.mxu0 0.0
  %699 = vmatpush.msra.mxu0 0.0
  %700 = vmatpush.msra.mxu0 0.0
  %701 = vmatpush.msra.mxu0 0.0
  %702 = vmatpush.msra.mxu0 0.0
  %703 = vmatpush.msra.mxu0 0.0
  %704 = vmatpush.msra.mxu0 0.0
  %705 = vmatpush.msra.mxu0 %v380
  %706 = vmatpush.msra.mxu0 %v378
  %707 = vmatpush.msra.mxu0 %v376
  %708 = vmatpush.msra.mxu0 %v374
  %709 = vmatpush.msra.mxu0 %v372
  %710 = vmatpush.msra.mxu0 %v370
  %711 = vmatpush.msra.mxu0 %v368
  %712 = vmatpush.msra.mxu0 %v366
  %713 = vmatmul.f32.gmra.mxu0 %v675
  %v714 = vpop.f32.mrf.mxu0
  %v715 = vadd.f32 %v475, %v714
  %716 = vdwg.mxu0
  %v717 = vtanh.pop %v695
  %v718 = vtanh.pop %v715
  %v719 = vsel %vm452, %v717, %v695
  %v720 = vsel %vm453, %v718, %v715
  %v721 = vmul.f32 %v695, 0.5
  %v722 = vmul.f32 %v721, 1.442695
  %v723 = vpow.pop %v722
  %725 = vrot.lane.b32.xlu0 %v673, 64
  %v726 = vpop.permute.xlu0 %725
  %v728 = vmul.f32 %v723, %v726
  %730 = vrot.lane.b32.xlu0 %v728, 64
  %v731 = vpop.permute.xlu0 %730
  %v733 = vadd.f32 %v695, %v731
  %735 = vrot.lane.b32.xlu0 %v671, 64
  %v736 = vpop.permute.xlu0 %735
  %v738 = vsel %vm407, %v658, %v736
  %v741 = vrot.slane %v738, 6
  %v742 = vsel %vm543, %v657, %v741
  %s744 = scalar_lea.vmem %s7, 4
  %745 = vst [vmem:[%s744] sm:$0xf] %v742
  %747 = vrot.lane.b32.xlu0 %v733, 64
  %v748 = vpop.permute.xlu0 %747
  %v750 = vsel %vm407, %v720, %v748
  %v753 = vrot.slane %v750, 6
  %v754 = vsel %vm543, %v719, %v753
  %s756 = scalar_lea.vmem %s8, 4
  %757 = vst [vmem:[%s756] sm:$0xf] %v754
  %v758 = vld [vmem:[%s5] sm:$0xff]
  %v759 = vld [vmem:[%s5 + $0x8] sm:$0xff]
  %v760 = vld [vmem:[%s5 + $0x10] sm:$0xff]
  %v761 = vld [vmem:[%s5 + $0x18] sm:$0xff]
  %v762 = vld [vmem:[%s5 + $0x20] sm:$0xff]
  %v763 = vld [vmem:[%s5 + $0x28] sm:$0xff]
  %v764 = vld [vmem:[%s5 + $0x30] sm:$0xff]
  %v765 = vld [vmem:[%s5 + $0x38] sm:$0xff]
  %v766 = vld [vmem:[%s5 + $0x40] sm:$0x1]
  %v767 = vperm.slane %v766, 0
  %v768 = vsel %vm407, %v733, 0
  %770 = vmatpush.msra.mxu0 0.0
  %771 = vmatpush.msra.mxu0 0.0
  %772 = vmatpush.msra.mxu0 0.0
  %773 = vmatpush.msra.mxu0 0.0
  %774 = vmatpush.msra.mxu0 0.0
  %775 = vmatpush.msra.mxu0 0.0
  %776 = vmatpush.msra.mxu0 0.0
  %777 = vmatpush.msra.mxu0 0.0
  %778 = vmatpush.msra.mxu0 %v765
  %779 = vmatpush.msra.mxu0 %v764
  %780 = vmatpush.msra.mxu0 %v763
  %781 = vmatpush.msra.mxu0 %v762
  %782 = vmatpush.msra.mxu0 %v761
  %783 = vmatpush.msra.mxu0 %v760
  %784 = vmatpush.msra.mxu0 %v759
  %785 = vmatpush.msra.mxu0 %v758
  %786 = vmatmul.f32.gmra.mxu0 %v768
  %v787 = vpop.f32.mrf.mxu0
  %v788 = vadd.f32 %v767, %v787
  %789 = vdwg.mxu0
  %vm790 = vcmp.lt.s32.totalorder %v69, 0
  %v791 = vsub.s32 0, %v69
  %v792 = vsel %vm790, %v791, %v69
  %v793 = vand.u32 %v792, 65535
  %v794 = vshrl.u32 %v792, 16
  %v796 = vmul.u32 %v793, 43691
  %v797 = vmul.u32 %v793, 43690
  %v798 = vmul.u32 %v794, 43691
  %v799 = vmul.u32 %v794, 43690
  %v800 = vshll.u32 %v797, 16
  %v801 = vshrl.u32 %v797, 16
  %v802 = vshll.u32 %v798, 16
  %v803 = vshrl.u32 %v798, 16
  %vm804 = vc.u32 %v796, %v800
  %v805 = vsel %vm804, 1, 0
  %v806 = vadd.s32 %v796, %v800
  %v807 = vadd.s32 %v799, %v805
  %vm808 = vc.u32 %v806, %v802
  %v809 = vsel %vm808, 1, 0
  %v810 = vadd.s32 %v806, %v802
  %v811 = vadd.s32 %v807, %v809
  %v812 = vadd.s32 %v811, %v801
  %v813 = vadd.s32 %v812, %v803
  %v814 = vshrl.u32 %v813, 3
  %v815 = vmul.u32 %v814, 12
  %v816 = vsub.s32 %v792, %v815
  %v817 = vsub.s32 0, %v816
  %v818 = vsel %vm790, %v817, %v816
  %vm819 = vcmp.ne.s32.totalorder %v818, 0
  %vm820 = vcmp.lt.s32.totalorder %v818, 0
  %vm821 = vmand %vm820, %vm819
  %v822 = vadd.s32 %v818, 12
  %v823 = vsel %vm821, %v822, %v818
  %vm824 = vcmp.eq.s32.totalorder %v823, 0
  %vm825 = vcmp.ge.s32.totalorder %v69, 96
  %vm826 = vmor %vm824, %vm825
  %v827 = vmax.f32 %v788, 0.0
  %vm828 = vcmp.ne.f32.partialorder %v788, %v788
  %v829 = vadd.f32 %v788, 0.0
  %v830 = vand.u32 2147483647, %v788
  %v831 = vsub.f32 0.0, %v830
  %v832 = vmul.f32 %v831, 1.442695
  %v833 = vpow.pop %v832
  %v834 = vadd.f32 %v833, 1.0
  %v835 = vlog2.pop %v834
  %v836 = vmul.f32 %v835, 0.6931472
  %v837 = vmul.f32 -0.5, %v833
  %v838 = vadd.f32 %v837, 1.0
  %v839 = vmul.f32 %v838, %v833
  %v840 = vand.u32 2147483647, %v833
  %vm841 = vcmp.lt.f32.partialorder %v840, 0.0004427343
  %v842 = vsel %vm841, %v839, %v836
  %v843 = vadd.f32 %v827, %v842
  %v844 = vsel %vm828, %v829, %v843
  %v845 = vsel %vm826, %v788, %v844
  %846 = vst [vmem:[%s9] sm:$0x3] %v845
  // Predicated region
  $region30: #{_lambda_.1} parent=0 // pred_check
    _
  $region31: #{_lambda_.1} parent=0 // pred_check_branch
    %848 = sbr.rel (0) target = $region33
  $region32: #{_lambda_.1} parent=0 // pred_region
    _
  $region33: #{_lambda_.1} parent=0 // pred_fallthru
    _
  // Predicated region
  $region34: #{_lambda_.1} parent=0 // pred_check
    _
  $region35: #{_lambda_.1} parent=0 // pred_check_branch
    %850 = sbr.rel (0) target = $region37
  $region36: #{_lambda_.1} parent=0 // pred_region
    _
  $region37: #{_lambda_.1} parent=0 // pred_fallthru
    _
  // Predicated region
  $region38: #{_lambda_.1} parent=0 // pred_check
    _
  $region39: #{_lambda_.1} parent=0 // pred_check_branch
    %852 = sbr.rel (0) target = $region41
  $region40: #{_lambda_.1} parent=0 // pred_region
    _
  $region41: #{_lambda_.1} parent=0 // pred_fallthru
    _
  // Predicated region
  $region42: #{_lambda_.1} parent=0 // pred_check
    _
  $region43: #{_lambda_.1} parent=0 // pred_check_branch
    %854 = sbr.rel (0) target = $region45
  $region44: #{_lambda_.1} parent=0 // pred_region
    _
  $region45: #{_lambda_.1} parent=0 // pred_fallthru
    _
  // Predicated region
  $region46: #{_lambda_.1} parent=0 // pred_check
    _
  $region47: #{_lambda_.1} parent=0 // pred_check_branch
    %856 = sbr.rel (0) target = $region49
  $region48: #{_lambda_.1} parent=0 // pred_region
    _
  $region49: #{_lambda_.1} parent=0 // pred_fallthru
    _
  // Predicated region
  $region50: #{_lambda_.1} parent=0 // pred_check
    _
  $region51: #{_lambda_.1} parent=0 // pred_check_branch
    %858 = sbr.rel (0) target = $region53
  $region52: #{_lambda_.1} parent=0 // pred_region
    _
  $region53: #{_lambda_.1} parent=0 // pred_fallthru
    _

</llo_original>
